<compile_context>
chip_gen: v7x
topology: tpu7x:2x2x1
jax: 0.10.0
libtpu: 0.0.40
codegen_flags: <defaults>
</compile_context>

<pallas_src>
import math

import jax
import jax.numpy as jnp
from jax.experimental import pallas as pl
from jax.experimental.pallas import tpu as pltpu

NODE_TYPES = ("paper", "author")
EDGE_TYPES = (
    ("author", "writes", "paper"),
    ("paper", "cites", "paper"),
    ("paper", "written_by", "author"),
)
DIM = (32, 16)
NUM_NODES = {"paper": 24, "author": 16}
N_PAD = max(NUM_NODES.values())   # shared sublane extent of the packed layout (24 = 3 sublanes)
NA = NUM_NODES["author"]
D0, D1 = DIM                      # 32, 16


# ------------------------------- fused Pallas kernel ------------------------------- #

def _fused_encoder_kernel(xp_ref, xa_ref, app_ref, aap_ref, apa_ref,
                          w_pre_ref, b_pre_ref,
                          wr1_ref, wl1_pp_ref, wl1_ap_ref, wl1_pa_ref, b1_ref,
                          w_in_ref, b_in_ref,
                          wr2_ref, wl2_pp_ref, wl2_ap_ref, wl2_pa_ref, b2_ref,
                          w_post_ref, b_post_ref,
                          o_ref, xbuf_ref):
    f32 = jnp.float32

    def mm(a, b):
        return jnp.dot(a, b, preferred_element_type=f32)

    # Row-normalized (mean-aggregation) adjacencies, zero-padded to [N_PAD, N_PAD].
    a_pp = app_ref[...]   # paper  -> paper
    a_ap = aap_ref[...]   # author -> paper (zero cols for padded author rows)
    a_pa = apa_ref[...]   # paper  -> author (zero rows for padded author dst)

    # ---- pack both node types into one lane-dense activation [N_PAD, 2*D0] ----
    xbuf_ref[:, 0:D0] = xp_ref[...]
    xbuf_ref[:, D0:2 * D0] = xa_ref[...]          # already zero-padded to N_PAD rows
    x = xbuf_ref[...]

    # ---- pre-MLP: one block-diagonal 64-wide matmul covers both node types ----
    x = mm(x, w_pre_ref[...]) + b_pre_ref[...]

    # ---- HeteroConv layer 1 (SAGEConv mean-aggr, summed over edge types) + inner MLP + ReLU ----
    xp, xa = x[:, 0:D0], x[:, D0:2 * D0]
    agg_pp = mm(a_pp, xp)
    agg_ap = mm(a_ap, xa)
    agg_pa = mm(a_pa, xp)
    acc = (mm(x, wr1_ref[...])                    # summed root (lin_r) terms, block-diag packed
           + mm(agg_pp, wl1_pp_ref[...])          # lin_l weights zero-padded into their dst half
           + mm(agg_ap, wl1_ap_ref[...])
           + mm(agg_pa, wl1_pa_ref[...])
           + b1_ref[...])                         # per-dst-type summed lin_l biases (hoisted)
    acc = jnp.maximum(mm(acc, w_in_ref[...]) + b_in_ref[...], 0.0)   # inner MLP + ReLU

    # ---- HeteroConv layer 2 (32 -> 16), packed output width 2*D1 = 32 ----
    xp, xa = acc[:, 0:D0], acc[:, D0:2 * D0]
    agg_pp = mm(a_pp, xp)
    agg_ap = mm(a_ap, xa)
    agg_pa = mm(a_pa, xp)
    acc = (mm(acc, wr2_ref[...])
           + mm(agg_pp, wl2_pp_ref[...])
           + mm(agg_ap, wl2_ap_ref[...])
           + mm(agg_pa, wl2_pa_ref[...])
           + b2_ref[...])

    # ---- post-MLP + per-type L2 normalize (rsqrt on EUP), single lane-dense store ----
    y = mm(acc, w_post_ref[...]) + b_post_ref[...]
    sq = y * y
    # 1/max(||y||, 1e-12) == rsqrt(max(||y||^2, 1e-24))  (F.normalize semantics)
    inv_p = jax.lax.rsqrt(jnp.maximum(jnp.sum(sq[:, 0:D1], axis=-1, keepdims=True), 1e-24))
    inv_a = jax.lax.rsqrt(jnp.maximum(jnp.sum(sq[:, D1:2 * D1], axis=-1, keepdims=True), 1e-24))
    lane = jax.lax.broadcasted_iota(jnp.int32, y.shape, 1)
    o_ref[...] = (y * jnp.where(lane < D1, inv_p, inv_a)).astype(o_ref.dtype)


def _vmem():
    return pl.BlockSpec(memory_space=pltpu.MemorySpace.VMEM)


@jax.jit
def forward_pallas(x_paper, x_author, app, aap, apa, pk):
    xa_pad = jnp.pad(x_author, ((0, N_PAD - NA), (0, 0)))   # pad author rows to shared extent
    args = (x_paper, xa_pad, app, aap, apa,
            pk["w_pre"], pk["b_pre"],
            pk["wr1"], pk["wl1_pp"], pk["wl1_ap"], pk["wl1_pa"], pk["b1"],
            pk["w_in"], pk["b_in"],
            pk["wr2"], pk["wl2_pp"], pk["wl2_ap"], pk["wl2_pa"], pk["b2"],
            pk["w_post"], pk["b_post"])
    out = pl.pallas_call(
        _fused_encoder_kernel,
        out_shape=jax.ShapeDtypeStruct((N_PAD, 2 * D1), jnp.float32),
        in_specs=[_vmem() for _ in args],
        out_specs=_vmem(),
        scratch_shapes=[pltpu.VMEM((N_PAD, 2 * D0), jnp.float32)],
    )(*args)
    return {"paper": out[:NUM_NODES["paper"], 0:D1],
            "author": out[:NUM_NODES["author"], D1:2 * D1]}


# --------------------------- parameters & packing (host/JAX) --------------------------- #

def init_linear(key, d_in, d_out, bias=True):
    k1, k2 = jax.random.split(key)
    bound = 1.0 / math.sqrt(d_in)
    w = jax.random.uniform(k1, (d_in, d_out), jnp.float32, -bound, bound)
    b = (jax.random.uniform(k2, (1, d_out), jnp.float32, -bound, bound)
         if bias else jnp.zeros((1, d_out), jnp.float32))
    return w, b


def init_params(key):
    keys = iter(jax.random.split(key, 64))
    params = {}
    # pre_mlp: Linear(dim[0], dim[0]) per node type
    params["pre"] = {nt: init_linear(next(keys), DIM[0], DIM[0]) for nt in NODE_TYPES}
    # conv layers: per layer, per edge type a SAGEConv: lin_l (wl, bl) on aggregated src, lin_r (wr) on dst
    in_dims = [DIM[0]] + list(DIM[:-1])
    params["conv"] = []
    for li, d_out in enumerate(DIM):
        d_in = in_dims[li]
        layer = {}
        for et in EDGE_TYPES:
            wl, bl = init_linear(next(keys), d_in, d_out, bias=True)
            wr, _ = init_linear(next(keys), d_in, d_out, bias=False)
            layer[et] = (wl, bl, wr)
        params["conv"].append(layer)
    # inner MLPs for dim[:-1]
    params["inner"] = [{nt: init_linear(next(keys), d, d) for nt in NODE_TYPES} for d in DIM[:-1]]
    # post_mlp: Linear(dim[-1], dim[-1]) per node type
    params["post"] = {nt: init_linear(next(keys), DIM[-1], DIM[-1]) for nt in NODE_TYPES}
    return params


def pack_params(params):
    """Precompute block-diagonal / lane-packed weights (incl. wr_sum and summed lin_l biases)."""
    f32 = jnp.float32
    et_ap, et_pp, et_pa = EDGE_TYPES

    def blockdiag(a, b):
        top = jnp.concatenate([a, jnp.zeros((a.shape[0], b.shape[1]), f32)], axis=1)
        bot = jnp.concatenate([jnp.zeros((b.shape[0], a.shape[1]), f32), b], axis=1)
        return jnp.concatenate([top, bot], axis=0)

    def pad_cols(w, left, right):
        return jnp.concatenate(
            [jnp.zeros((w.shape[0], left), f32), w, jnp.zeros((w.shape[0], right), f32)], axis=1)

    pk = {}
    pk["w_pre"] = blockdiag(params["pre"]["paper"][0], params["pre"]["author"][0])
    pk["b_pre"] = jnp.concatenate([params["pre"]["paper"][1], params["pre"]["author"][1]], axis=1)

    for li, tag in ((0, "1"), (1, "2")):
        layer = params["conv"][li]
        d_out = DIM[li]
        wr_paper = layer[et_ap][2] + layer[et_pp][2]      # summed lin_r weights into 'paper'
        wr_author = layer[et_pa][2]
        pk["wr" + tag] = blockdiag(wr_paper, wr_author)
        pk["wl" + tag + "_pp"] = pad_cols(layer[et_pp][0], 0, d_out)   # -> paper half
        pk["wl" + tag + "_ap"] = pad_cols(layer[et_ap][0], 0, d_out)   # -> paper half
        pk["wl" + tag + "_pa"] = pad_cols(layer[et_pa][0], d_out, 0)   # -> author half
        pk["b" + tag] = jnp.concatenate(
            [layer[et_pp][1] + layer[et_ap][1], layer[et_pa][1]], axis=1)

    pk["w_in"] = blockdiag(params["inner"][0]["paper"][0], params["inner"][0]["author"][0])
    pk["b_in"] = jnp.concatenate([params["inner"][0]["paper"][1],
                                  params["inner"][0]["author"][1]], axis=1)
    pk["w_post"] = blockdiag(params["post"]["paper"][0], params["post"]["author"][0])
    pk["b_post"] = jnp.concatenate([params["post"]["paper"][1],
                                    params["post"]["author"][1]], axis=1)
    return pk


def pack_adj(adj):
    """Zero-pad adjacencies to the shared [N_PAD, N_PAD] extent (padded rows/cols are zero)."""
    et_ap, et_pp, et_pa = EDGE_TYPES
    app = adj[et_pp]                                             # [24, 24]
    aap = jnp.pad(adj[et_ap], ((0, 0), (0, N_PAD - NA)))         # [24, 16] -> [24, 24]
    apa = jnp.pad(adj[et_pa], ((0, N_PAD - NA), (0, 0)))         # [16, 24] -> [24, 24]
    return app, aap, apa


# --------------------------------- pure-jnp reference --------------------------------- #

def forward_reference(x_dict, adj, params):
    """Pure-jnp reference mirroring the PyTorch forward semantics (unpacked params)."""
    x_dict = {nt: x_dict[nt] @ params["pre"][nt][0] + params["pre"][nt][1] for nt in NODE_TYPES}
    for li in range(len(DIM)):
        is_last = li == len(DIM) - 1
        layer = params["conv"][li]
        new_x = {}
        for nt in NODE_TYPES:
            edge_list = [et for et in EDGE_TYPES if et[2] == nt]
            acc = sum(x_dict[nt] @ layer[et][2] for et in edge_list)
            for et in edge_list:
                wl, bl, _ = layer[et]
                acc = acc + (adj[et] @ x_dict[et[0]]) @ wl + bl
            if not is_last:
                wm, bm = params["inner"][li][nt]
                acc = jnp.maximum(acc @ wm + bm, 0.0)
            new_x[nt] = acc
        x_dict = new_x
    out = {}
    for nt in NODE_TYPES:
        w, b = params["post"][nt]
        y = x_dict[nt] @ w + b
        norm = jnp.sqrt(jnp.sum(y * y, axis=-1, keepdims=True))
        out[nt] = y / jnp.maximum(norm, 1e-12)
    return out


if __name__ == "__main__":
    key = jax.random.PRNGKey(0)
    k_feat, k_adj, k_params = jax.random.split(key, 3)

    fk = jax.random.split(k_feat, len(NODE_TYPES))
    x_dict = {nt: jax.random.normal(fk[i], (NUM_NODES[nt], DIM[0]), jnp.float32)
              for i, nt in enumerate(NODE_TYPES)}

    # random dense adjacency per edge type, row-normalized (SAGEConv mean aggregation;
    # nodes without incoming edges aggregate to 0, matching scatter-mean).
    ak = jax.random.split(k_adj, len(EDGE_TYPES))
    adj = {}
    for i, et in enumerate(EDGE_TYPES):
        src, _, dst = et
        a = (jax.random.uniform(ak[i], (NUM_NODES[dst], NUM_NODES[src])) < 0.3).astype(jnp.float32)
        deg = jnp.sum(a, axis=1, keepdims=True)
        adj[et] = a / jnp.maximum(deg, 1.0)

    params = init_params(k_params)
    packed = pack_params(params)
    app, aap, apa = pack_adj(adj)

    out = forward_pallas(x_dict["paper"], x_dict["author"], app, aap, apa, packed)
    out = jax.tree_util.tree_map(jax.block_until_ready, out)

    ref = forward_reference(x_dict, adj, params)
    for nt in NODE_TYPES:
        assert out[nt].shape == (NUM_NODES[nt], DIM[-1])
        assert jnp.allclose(out[nt], ref[nt], rtol=1e-4, atol=2e-4), f"mismatch for node type {nt}"

    print("KERNEL_OK")
</pallas_src>

<mosaic_0001>
module attributes {stable_mosaic.version = 11 : i64} {
  func.func @_fused_encoder_kernel(%arg0: memref<24x32xf32, #tpu.memory_space<vmem>>, %arg1: memref<24x32xf32, #tpu.memory_space<vmem>>, %arg2: memref<24x24xf32, #tpu.memory_space<vmem>>, %arg3: memref<24x24xf32, #tpu.memory_space<vmem>>, %arg4: memref<24x24xf32, #tpu.memory_space<vmem>>, %arg5: memref<64x64xf32, #tpu.memory_space<vmem>>, %arg6: memref<1x64xf32, #tpu.memory_space<vmem>>, %arg7: memref<64x64xf32, #tpu.memory_space<vmem>>, %arg8: memref<32x64xf32, #tpu.memory_space<vmem>>, %arg9: memref<32x64xf32, #tpu.memory_space<vmem>>, %arg10: memref<32x64xf32, #tpu.memory_space<vmem>>, %arg11: memref<1x64xf32, #tpu.memory_space<vmem>>, %arg12: memref<64x64xf32, #tpu.memory_space<vmem>>, %arg13: memref<1x64xf32, #tpu.memory_space<vmem>>, %arg14: memref<64x32xf32, #tpu.memory_space<vmem>>, %arg15: memref<32x32xf32, #tpu.memory_space<vmem>>, %arg16: memref<32x32xf32, #tpu.memory_space<vmem>>, %arg17: memref<32x32xf32, #tpu.memory_space<vmem>>, %arg18: memref<1x32xf32, #tpu.memory_space<vmem>>, %arg19: memref<32x32xf32, #tpu.memory_space<vmem>>, %arg20: memref<1x32xf32, #tpu.memory_space<vmem>>, %arg21: memref<24x32xf32, #tpu.memory_space<vmem>>, %arg22: memref<24x64xf32, #tpu.memory_space<vmem>>) attributes {dimension_semantics = [], scalar_prefetch = 0 : i64, scratch_operands = 1 : i64, tpu.core_type = #tpu.core_type<tc>} {
    %c0 = arith.constant 0 : index
    %c0_0 = arith.constant 0 : index
    %0 = vector.load %arg2[%c0, %c0_0] : memref<24x24xf32, #tpu.memory_space<vmem>>, vector<24x24xf32>
    %c0_1 = arith.constant 0 : index
    %c0_2 = arith.constant 0 : index
    %1 = vector.load %arg3[%c0_1, %c0_2] : memref<24x24xf32, #tpu.memory_space<vmem>>, vector<24x24xf32>
    %c0_3 = arith.constant 0 : index
    %c0_4 = arith.constant 0 : index
    %2 = vector.load %arg4[%c0_3, %c0_4] : memref<24x24xf32, #tpu.memory_space<vmem>>, vector<24x24xf32>
    %c0_5 = arith.constant 0 : index
    %c0_6 = arith.constant 0 : index
    %3 = vector.load %arg0[%c0_5, %c0_6] : memref<24x32xf32, #tpu.memory_space<vmem>>, vector<24x32xf32>
    %c0_7 = arith.constant 0 : index
    %c0_8 = arith.constant 0 : index
    %4 = vector.load %arg22[%c0_7, %c0_8] : memref<24x64xf32, #tpu.memory_space<vmem>>, vector<24x32xf32>
    tpu.vector_store %arg22[%c0_7, %c0_8], %3 {strides = array<i32>} : memref<24x64xf32, #tpu.memory_space<vmem>>, vector<24x32xf32>,
    %c0_9 = arith.constant 0 : index
    %c0_10 = arith.constant 0 : index
    %5 = vector.load %arg1[%c0_9, %c0_10] : memref<24x32xf32, #tpu.memory_space<vmem>>, vector<24x32xf32>
    %c0_11 = arith.constant 0 : index
    %c32 = arith.constant 32 : index
    %6 = vector.load %arg22[%c0_11, %c32] : memref<24x64xf32, #tpu.memory_space<vmem>>, vector<24x32xf32>
    tpu.vector_store %arg22[%c0_11, %c32], %5 {strides = array<i32>} : memref<24x64xf32, #tpu.memory_space<vmem>>, vector<24x32xf32>,
    %c0_12 = arith.constant 0 : index
    %c0_13 = arith.constant 0 : index
    %7 = vector.load %arg22[%c0_12, %c0_13] : memref<24x64xf32, #tpu.memory_space<vmem>>, vector<24x64xf32>
    %c0_14 = arith.constant 0 : index
    %c0_15 = arith.constant 0 : index
    %8 = vector.load %arg5[%c0_14, %c0_15] : memref<64x64xf32, #tpu.memory_space<vmem>>, vector<64x64xf32>
    %cst = arith.constant dense<0.000000e+00> : vector<24x64xf32>
    %9 = tpu.matmul %7, %8, %cst {dimension_numbers = #tpu.dot_dimension_numbers<[1], [0], [0], [1], [0, 0, 1, 1], [], []>} : vector<24x64xf32>, vector<64x64xf32>, vector<24x64xf32> -> vector<24x64xf32>
    %c0_16 = arith.constant 0 : index
    %c0_17 = arith.constant 0 : index
    %10 = vector.load %arg6[%c0_16, %c0_17] : memref<1x64xf32, #tpu.memory_space<vmem>>, vector<1x64xf32>
    %11 = vector.broadcast %10 : vector<1x64xf32> to vector<24x64xf32>
    %12 = arith.addf %9, %11 : vector<24x64xf32>
    %13 = vector.extract_strided_slice %12 {offsets = [0, 0], sizes = [24, 32], strides = [1, 1]} : vector<24x64xf32> to vector<24x32xf32>
    %14 = vector.extract_strided_slice %12 {offsets = [0, 32], sizes = [24, 32], strides = [1, 1]} : vector<24x64xf32> to vector<24x32xf32>
    %cst_18 = arith.constant dense<0.000000e+00> : vector<24x32xf32>
    %15 = tpu.matmul %0, %13, %cst_18 {dimension_numbers = #tpu.dot_dimension_numbers<[1], [0], [0], [1], [0, 0, 1, 1], [], []>} : vector<24x24xf32>, vector<24x32xf32>, vector<24x32xf32> -> vector<24x32xf32>
    %cst_19 = arith.constant dense<0.000000e+00> : vector<24x32xf32>
    %16 = tpu.matmul %1, %14, %cst_19 {dimension_numbers = #tpu.dot_dimension_numbers<[1], [0], [0], [1], [0, 0, 1, 1], [], []>} : vector<24x24xf32>, vector<24x32xf32>, vector<24x32xf32> -> vector<24x32xf32>
    %cst_20 = arith.constant dense<0.000000e+00> : vector<24x32xf32>
    %17 = tpu.matmul %2, %13, %cst_20 {dimension_numbers = #tpu.dot_dimension_numbers<[1], [0], [0], [1], [0, 0, 1, 1], [], []>} : vector<24x24xf32>, vector<24x32xf32>, vector<24x32xf32> -> vector<24x32xf32>
    %c0_21 = arith.constant 0 : index
    %c0_22 = arith.constant 0 : index
    %18 = vector.load %arg7[%c0_21, %c0_22] : memref<64x64xf32, #tpu.memory_space<vmem>>, vector<64x64xf32>
    %cst_23 = arith.constant dense<0.000000e+00> : vector<24x64xf32>
    %19 = tpu.matmul %12, %18, %cst_23 {dimension_numbers = #tpu.dot_dimension_numbers<[1], [0], [0], [1], [0, 0, 1, 1], [], []>} : vector<24x64xf32>, vector<64x64xf32>, vector<24x64xf32> -> vector<24x64xf32>
    %c0_24 = arith.constant 0 : index
    %c0_25 = arith.constant 0 : index
    %20 = vector.load %arg8[%c0_24, %c0_25] : memref<32x64xf32, #tpu.memory_space<vmem>>, vector<32x64xf32>
    %cst_26 = arith.constant dense<0.000000e+00> : vector<24x64xf32>
    %21 = tpu.matmul %15, %20, %cst_26 {dimension_numbers = #tpu.dot_dimension_numbers<[1], [0], [0], [1], [0, 0, 1, 1], [], []>} : vector<24x32xf32>, vector<32x64xf32>, vector<24x64xf32> -> vector<24x64xf32>
    %22 = arith.addf %19, %21 : vector<24x64xf32>
    %c0_27 = arith.constant 0 : index
    %c0_28 = arith.constant 0 : index
    %23 = vector.load %arg9[%c0_27, %c0_28] : memref<32x64xf32, #tpu.memory_space<vmem>>, vector<32x64xf32>
    %cst_29 = arith.constant dense<0.000000e+00> : vector<24x64xf32>
    %24 = tpu.matmul %16, %23, %cst_29 {dimension_numbers = #tpu.dot_dimension_numbers<[1], [0], [0], [1], [0, 0, 1, 1], [], []>} : vector<24x32xf32>, vector<32x64xf32>, vector<24x64xf32> -> vector<24x64xf32>
    %25 = arith.addf %22, %24 : vector<24x64xf32>
    %c0_30 = arith.constant 0 : index
    %c0_31 = arith.constant 0 : index
    %26 = vector.load %arg10[%c0_30, %c0_31] : memref<32x64xf32, #tpu.memory_space<vmem>>, vector<32x64xf32>
    %cst_32 = arith.constant dense<0.000000e+00> : vector<24x64xf32>
    %27 = tpu.matmul %17, %26, %cst_32 {dimension_numbers = #tpu.dot_dimension_numbers<[1], [0], [0], [1], [0, 0, 1, 1], [], []>} : vector<24x32xf32>, vector<32x64xf32>, vector<24x64xf32> -> vector<24x64xf32>
    %28 = arith.addf %25, %27 : vector<24x64xf32>
    %c0_33 = arith.constant 0 : index
    %c0_34 = arith.constant 0 : index
    %29 = vector.load %arg11[%c0_33, %c0_34] : memref<1x64xf32, #tpu.memory_space<vmem>>, vector<1x64xf32>
    %30 = vector.broadcast %29 : vector<1x64xf32> to vector<24x64xf32>
    %31 = arith.addf %28, %30 : vector<24x64xf32>
    %c0_35 = arith.constant 0 : index
    %c0_36 = arith.constant 0 : index
    %32 = vector.load %arg12[%c0_35, %c0_36] : memref<64x64xf32, #tpu.memory_space<vmem>>, vector<64x64xf32>
    %cst_37 = arith.constant dense<0.000000e+00> : vector<24x64xf32>
    %33 = tpu.matmul %31, %32, %cst_37 {dimension_numbers = #tpu.dot_dimension_numbers<[1], [0], [0], [1], [0, 0, 1, 1], [], []>} : vector<24x64xf32>, vector<64x64xf32>, vector<24x64xf32> -> vector<24x64xf32>
    %c0_38 = arith.constant 0 : index
    %c0_39 = arith.constant 0 : index
    %34 = vector.load %arg13[%c0_38, %c0_39] : memref<1x64xf32, #tpu.memory_space<vmem>>, vector<1x64xf32>
    %35 = vector.broadcast %34 : vector<1x64xf32> to vector<24x64xf32>
    %36 = arith.addf %33, %35 : vector<24x64xf32>
    %cst_40 = arith.constant 0.000000e+00 : f32
    %37 = vector.broadcast %cst_40 : f32 to vector<24x64xf32>
    %38 = arith.maximumf %36, %37 : vector<24x64xf32>
    %39 = vector.extract_strided_slice %38 {offsets = [0, 0], sizes = [24, 32], strides = [1, 1]} : vector<24x64xf32> to vector<24x32xf32>
    %40 = vector.extract_strided_slice %38 {offsets = [0, 32], sizes = [24, 32], strides = [1, 1]} : vector<24x64xf32> to vector<24x32xf32>
    %cst_41 = arith.constant dense<0.000000e+00> : vector<24x32xf32>
    %41 = tpu.matmul %0, %39, %cst_41 {dimension_numbers = #tpu.dot_dimension_numbers<[1], [0], [0], [1], [0, 0, 1, 1], [], []>} : vector<24x24xf32>, vector<24x32xf32>, vector<24x32xf32> -> vector<24x32xf32>
    %cst_42 = arith.constant dense<0.000000e+00> : vector<24x32xf32>
    %42 = tpu.matmul %1, %40, %cst_42 {dimension_numbers = #tpu.dot_dimension_numbers<[1], [0], [0], [1], [0, 0, 1, 1], [], []>} : vector<24x24xf32>, vector<24x32xf32>, vector<24x32xf32> -> vector<24x32xf32>
    %cst_43 = arith.constant dense<0.000000e+00> : vector<24x32xf32>
    %43 = tpu.matmul %2, %39, %cst_43 {dimension_numbers = #tpu.dot_dimension_numbers<[1], [0], [0], [1], [0, 0, 1, 1], [], []>} : vector<24x24xf32>, vector<24x32xf32>, vector<24x32xf32> -> vector<24x32xf32>
    %c0_44 = arith.constant 0 : index
    %c0_45 = arith.constant 0 : index
    %44 = vector.load %arg14[%c0_44, %c0_45] : memref<64x32xf32, #tpu.memory_space<vmem>>, vector<64x32xf32>
    %cst_46 = arith.constant dense<0.000000e+00> : vector<24x32xf32>
    %45 = tpu.matmul %38, %44, %cst_46 {dimension_numbers = #tpu.dot_dimension_numbers<[1], [0], [0], [1], [0, 0, 1, 1], [], []>} : vector<24x64xf32>, vector<64x32xf32>, vector<24x32xf32> -> vector<24x32xf32>
    %c0_47 = arith.constant 0 : index
    %c0_48 = arith.constant 0 : index
    %46 = vector.load %arg15[%c0_47, %c0_48] : memref<32x32xf32, #tpu.memory_space<vmem>>, vector<32x32xf32>
    %cst_49 = arith.constant dense<0.000000e+00> : vector<24x32xf32>
    %47 = tpu.matmul %41, %46, %cst_49 {dimension_numbers = #tpu.dot_dimension_numbers<[1], [0], [0], [1], [0, 0, 1, 1], [], []>} : vector<24x32xf32>, vector<32x32xf32>, vector<24x32xf32> -> vector<24x32xf32>
    %48 = arith.addf %45, %47 : vector<24x32xf32>
    %c0_50 = arith.constant 0 : index
    %c0_51 = arith.constant 0 : index
    %49 = vector.load %arg16[%c0_50, %c0_51] : memref<32x32xf32, #tpu.memory_space<vmem>>, vector<32x32xf32>
    %cst_52 = arith.constant dense<0.000000e+00> : vector<24x32xf32>
    %50 = tpu.matmul %42, %49, %cst_52 {dimension_numbers = #tpu.dot_dimension_numbers<[1], [0], [0], [1], [0, 0, 1, 1], [], []>} : vector<24x32xf32>, vector<32x32xf32>, vector<24x32xf32> -> vector<24x32xf32>
    %51 = arith.addf %48, %50 : vector<24x32xf32>
    %c0_53 = arith.constant 0 : index
    %c0_54 = arith.constant 0 : index
    %52 = vector.load %arg17[%c0_53, %c0_54] : memref<32x32xf32, #tpu.memory_space<vmem>>, vector<32x32xf32>
    %cst_55 = arith.constant dense<0.000000e+00> : vector<24x32xf32>
    %53 = tpu.matmul %43, %52, %cst_55 {dimension_numbers = #tpu.dot_dimension_numbers<[1], [0], [0], [1], [0, 0, 1, 1], [], []>} : vector<24x32xf32>, vector<32x32xf32>, vector<24x32xf32> -> vector<24x32xf32>
    %54 = arith.addf %51, %53 : vector<24x32xf32>
    %c0_56 = arith.constant 0 : index
    %c0_57 = arith.constant 0 : index
    %55 = vector.load %arg18[%c0_56, %c0_57] : memref<1x32xf32, #tpu.memory_space<vmem>>, vector<1x32xf32>
    %56 = vector.broadcast %55 : vector<1x32xf32> to vector<24x32xf32>
    %57 = arith.addf %54, %56 : vector<24x32xf32>
    %c0_58 = arith.constant 0 : index
    %c0_59 = arith.constant 0 : index
    %58 = vector.load %arg19[%c0_58, %c0_59] : memref<32x32xf32, #tpu.memory_space<vmem>>, vector<32x32xf32>
    %cst_60 = arith.constant dense<0.000000e+00> : vector<24x32xf32>
    %59 = tpu.matmul %57, %58, %cst_60 {dimension_numbers = #tpu.dot_dimension_numbers<[1], [0], [0], [1], [0, 0, 1, 1], [], []>} : vector<24x32xf32>, vector<32x32xf32>, vector<24x32xf32> -> vector<24x32xf32>
    %c0_61 = arith.constant 0 : index
    %c0_62 = arith.constant 0 : index
    %60 = vector.load %arg20[%c0_61, %c0_62] : memref<1x32xf32, #tpu.memory_space<vmem>>, vector<1x32xf32>
    %61 = vector.broadcast %60 : vector<1x32xf32> to vector<24x32xf32>
    %62 = arith.addf %59, %61 : vector<24x32xf32>
    %63 = arith.mulf %62, %62 : vector<24x32xf32>
    %64 = vector.extract_strided_slice %63 {offsets = [0, 0], sizes = [24, 16], strides = [1, 1]} : vector<24x32xf32> to vector<24x16xf32>
    %cst_63 = arith.constant dense<0.000000e+00> : vector<24xf32>
    %65 = vector.multi_reduction <add>, %64, %cst_63 [1] : vector<24x16xf32> to vector<24xf32>
    %66 = vector.shape_cast %65 : vector<24xf32> to vector<24x1xf32>
    %cst_64 = arith.constant 1.000000e-24 : f32
    %67 = vector.broadcast %cst_64 : f32 to vector<24x1xf32>
    %68 = arith.maximumf %66, %67 : vector<24x1xf32>
    %69 = math.rsqrt %68 : vector<24x1xf32>
    %70 = vector.extract_strided_slice %63 {offsets = [0, 16], sizes = [24, 16], strides = [1, 1]} : vector<24x32xf32> to vector<24x16xf32>
    %cst_65 = arith.constant dense<0.000000e+00> : vector<24xf32>
    %71 = vector.multi_reduction <add>, %70, %cst_65 [1] : vector<24x16xf32> to vector<24xf32>
    %72 = vector.shape_cast %71 : vector<24xf32> to vector<24x1xf32>
    %cst_66 = arith.constant 1.000000e-24 : f32
    %73 = vector.broadcast %cst_66 : f32 to vector<24x1xf32>
    %74 = arith.maximumf %72, %73 : vector<24x1xf32>
    %75 = math.rsqrt %74 : vector<24x1xf32>
    %76 = tpu.iota {dimensions = array<i32: 1>} : vector<24x32xi32>
    %c16_i32 = arith.constant 16 : i32
    %77 = vector.broadcast %c16_i32 : i32 to vector<24x32xi32>
    %78 = arith.cmpi slt, %76, %77 : vector<24x32xi32>
    %79 = vector.shape_cast %69 : vector<24x1xf32> to vector<24x1xf32>
    %80 = vector.broadcast %79 : vector<24x1xf32> to vector<24x32xf32>
    %81 = vector.shape_cast %75 : vector<24x1xf32> to vector<24x1xf32>
    %82 = vector.broadcast %81 : vector<24x1xf32> to vector<24x32xf32>
    %83 = arith.select %78, %80, %82 : vector<24x32xi1>, vector<24x32xf32>
    %84 = arith.mulf %62, %83 : vector<24x32xf32>
    %c0_67 = arith.constant 0 : index
    %c0_68 = arith.constant 0 : index
    %85 = vector.load %arg21[%c0_67, %c0_68] : memref<24x32xf32, #tpu.memory_space<vmem>>, vector<24x32xf32>
    tpu.vector_store %arg21[%c0_67, %c0_68], %84 {strides = array<i32>} : memref<24x32xf32, #tpu.memory_space<vmem>>, vector<24x32xf32>,
    return
  }
}

</mosaic_0001>

<llo_original>
// kernel: forward_pallas.1
$region0: #{forward_pallas.1}
  #allocation0 [shape = 'u32[]', space=smem, size = 0x4, offset = 0x4, fixed_abs, tag = 'smem constant byte address 0x4 - core index']
  #allocation1 [shape = 'u32[144,128]{1,0:T(1,128)}', space=vmem, size = 0x12000, scoped, tag = 'internal scratch']
  #allocation2 [shape = 'f32[24,64]{1,0:T(8,128)}', space=vmem, size = 0x3000, scoped, tag = 'scratch operand']
  %s0 = inlined_call_operand.hbm [shape: f32[24,32], index: 0, kind: input, shape index: {}]
  %s1 = inlined_call_operand.vmem [shape: f32[24,32], index: 1, kind: input, shape index: {}]
  %s2 = inlined_call_operand.hbm [shape: f32[24,24], index: 2, kind: input, shape index: {}]
  %s3 = inlined_call_operand.hbm [shape: f32[24,24], index: 3, kind: input, shape index: {}]
  %s4 = inlined_call_operand.hbm [shape: f32[24,24], index: 4, kind: input, shape index: {}]
  %s5 = inlined_call_operand.vmem [shape: f32[64,64], index: 5, kind: input, shape index: {}]
  %s6 = inlined_call_operand.vmem [shape: f32[1,64], index: 6, kind: input, shape index: {}]
  %s7 = inlined_call_operand.vmem [shape: f32[64,64], index: 7, kind: input, shape index: {}]
  %s8 = inlined_call_operand.vmem [shape: f32[32,64], index: 8, kind: input, shape index: {}]
  %s9 = inlined_call_operand.hbm [shape: f32[32,64], index: 9, kind: input, shape index: {}]
  %s10 = inlined_call_operand.hbm [shape: f32[32,64], index: 10, kind: input, shape index: {}]
  %s11 = inlined_call_operand.hbm [shape: f32[1,64], index: 11, kind: input, shape index: {}]
  %s12 = inlined_call_operand.hbm [shape: f32[64,64], index: 12, kind: input, shape index: {}]
  %s13 = inlined_call_operand.hbm [shape: f32[1,64], index: 13, kind: input, shape index: {}]
  %s14 = inlined_call_operand.vmem [shape: f32[64,32], index: 14, kind: input, shape index: {}]
  %s15 = inlined_call_operand.hbm [shape: f32[32,32], index: 15, kind: input, shape index: {}]
  %s16 = inlined_call_operand.hbm [shape: f32[32,32], index: 16, kind: input, shape index: {}]
  %s17 = inlined_call_operand.hbm [shape: f32[32,32], index: 17, kind: input, shape index: {}]
  %s18 = inlined_call_operand.hbm [shape: f32[1,32], index: 18, kind: input, shape index: {}]
  %s19 = inlined_call_operand.hbm [shape: f32[32,32], index: 19, kind: input, shape index: {}]
  %s20 = inlined_call_operand.hbm [shape: f32[1,32], index: 20, kind: input, shape index: {}]
  %s21 = inlined_call_operand.vmem [shape: f32[24,32], index: 21, kind: output, shape index: {}]
  %s22 = sld [smem:[#allocation0]]
  $region154: #{forward_pallas.1} parent=0
    _
  %s24 = ssub.s32 1, %s22
  %s25 = scalar_select 0, %s24, %s22
  $region1: #{forward_pallas.1} parent=0
    #allocation3 [shape = 'u8[12288]{0}', space=vmem, size = 0x3000, scoped, tag = 'input window, operand 0, single buffered']
    #allocation4 [shape = 's32[1]{0}', space=sflag, size = 0x4, scoped, tag = 'scoped memory for forward_pallas.1']
    #allocation5 [shape = 'u8[12288]{0}', space=vmem, size = 0x3000, scoped, tag = 'input window, operand 2, single buffered']
    #allocation6 [shape = 's32[1]{0}', space=sflag, size = 0x4, scoped, tag = 'scoped memory for forward_pallas.1']
    #allocation7 [shape = 'u8[12288]{0}', space=vmem, size = 0x3000, scoped, tag = 'input window, operand 3, single buffered']
    #allocation8 [shape = 'u8[12288]{0}', space=vmem, size = 0x3000, scoped, tag = 'input window, operand 4, single buffered']
    #allocation9 [shape = 's32[1]{0}', space=sflag, size = 0x4, scoped, tag = 'scoped memory for forward_pallas.1']
    #allocation10 [shape = 'u8[16384]{0}', space=vmem, size = 0x4000, scoped, tag = 'input window, operand 9, single buffered']
    #allocation11 [shape = 'u8[16384]{0}', space=vmem, size = 0x4000, scoped, tag = 'input window, operand 10, single buffered']
    #allocation12 [shape = 's32[1]{0}', space=sflag, size = 0x4, scoped, tag = 'scoped memory for forward_pallas.1']
    #allocation13 [shape = 'u8[512]{0}', space=vmem, size = 0x400, scoped, tag = 'input window, operand 11, single buffered']
    #allocation14 [shape = 'u8[32768]{0}', space=vmem, size = 0x8000, scoped, tag = 'input window, operand 12, single buffered']
    #allocation15 [shape = 's32[1]{0}', space=sflag, size = 0x4, scoped, tag = 'scoped memory for forward_pallas.1']
    #allocation16 [shape = 'u8[512]{0}', space=vmem, size = 0x400, scoped, tag = 'input window, operand 13, single buffered']
    #allocation17 [shape = 'u8[16384]{0}', space=vmem, size = 0x4000, scoped, tag = 'input window, operand 15, single buffered']
    #allocation18 [shape = 's32[1]{0}', space=sflag, size = 0x4, scoped, tag = 'scoped memory for forward_pallas.1']
    #allocation19 [shape = 'u8[16384]{0}', space=vmem, size = 0x4000, scoped, tag = 'input window, operand 16, single buffered']
    #allocation20 [shape = 'u8[16384]{0}', space=vmem, size = 0x4000, scoped, tag = 'input window, operand 17, single buffered']
    #allocation21 [shape = 's32[1]{0}', space=sflag, size = 0x4, scoped, tag = 'scoped memory for forward_pallas.1']
    #allocation22 [shape = 'u8[512]{0}', space=vmem, size = 0x400, scoped, tag = 'input window, operand 18, single buffered']
    #allocation23 [shape = 'u8[16384]{0}', space=vmem, size = 0x4000, scoped, tag = 'input window, operand 19, single buffered']
    #allocation24 [shape = 's32[1]{0}', space=sflag, size = 0x4, scoped, tag = 'scoped memory for forward_pallas.1']
    #allocation25 [shape = 'u8[512]{0}', space=vmem, size = 0x400, scoped, tag = 'input window, operand 20, single buffered']
    %26 = vsyncpa [#allocation4], 0
    %27 = vsyncpa [#allocation6], 0
    %28 = vsyncpa [#allocation9], 0
    %29 = vsyncpa [#allocation12], 0
    %30 = vsyncpa [#allocation15], 0
    %31 = vsyncpa [#allocation18], 0
    %32 = vsyncpa [#allocation21], 0
    %33 = vsyncpa [#allocation24], 0
    // Predicated region
    $region2: #{forward_pallas.1} parent=1 // pred_check
      _
    $region3: #{forward_pallas.1} parent=1 // pred_check_branch
      %35 = sbr.rel (0) target = $region5
    $region4: #{forward_pallas.1} parent=1 // pred_region
      %s37 = ssub.s32 384, 384
      %38 = vsyncadd [#allocation4], %s37
      %s39 = sshll.u32 [#allocation3], 4
      %s40 = int_to_ptr.vmem [resolvable:$true] %s39
      %45 = dma.hbm_to_vmem [thread:$0]  %s0, 384, %s40, [#allocation4], 128, 128, 8
    $region5: #{forward_pallas.1} parent=1 // pred_fallthru
      _
    // Predicated region
    $region6: #{forward_pallas.1} parent=1 // pred_check
      _
    $region7: #{forward_pallas.1} parent=1 // pred_check_branch
      %47 = sbr.rel (0) target = $region9
    $region8: #{forward_pallas.1} parent=1 // pred_region
      _
    $region9: #{forward_pallas.1} parent=1 // pred_fallthru
      _
    // Predicated region
    $region10: #{forward_pallas.1} parent=1 // pred_check
      _
    $region11: #{forward_pallas.1} parent=1 // pred_check_branch
      %49 = sbr.rel (0) target = $region13
    $region12: #{forward_pallas.1} parent=1 // pred_region
      %s51 = ssub.s32 384, 384
      %52 = vsyncadd [#allocation6], %s51
      %s53 = sshll.u32 [#allocation5], 4
      %s54 = int_to_ptr.vmem [resolvable:$true] %s53
      %59 = dma.hbm_to_vmem [thread:$0]  %s2, 384, %s54, [#allocation6], 128, 128, 8
    $region13: #{forward_pallas.1} parent=1 // pred_fallthru
      _
    // Predicated region
    $region14: #{forward_pallas.1} parent=1 // pred_check
      _
    $region15: #{forward_pallas.1} parent=1 // pred_check_branch
      %61 = sbr.rel (0) target = $region17
    $region16: #{forward_pallas.1} parent=1 // pred_region
      %s63 = ssub.s32 384, 384
      %64 = vsyncadd [#allocation6], %s63
      %s65 = sshll.u32 [#allocation7], 4
      %s66 = int_to_ptr.vmem [resolvable:$true] %s65
      %71 = dma.hbm_to_vmem [thread:$0]  %s3, 384, %s66, [#allocation6], 128, 128, 8
    $region17: #{forward_pallas.1} parent=1 // pred_fallthru
      _
    // Predicated region
    $region18: #{forward_pallas.1} parent=1 // pred_check
      _
    $region19: #{forward_pallas.1} parent=1 // pred_check_branch
      %73 = sbr.rel (0) target = $region21
    $region20: #{forward_pallas.1} parent=1 // pred_region
      %s75 = ssub.s32 384, 384
      %76 = vsyncadd [#allocation9], %s75
      %s77 = sshll.u32 [#allocation8], 4
      %s78 = int_to_ptr.vmem [resolvable:$true] %s77
      %83 = dma.hbm_to_vmem [thread:$0]  %s4, 384, %s78, [#allocation9], 128, 128, 8
    $region21: #{forward_pallas.1} parent=1 // pred_fallthru
      _
    // Predicated region
    $region22: #{forward_pallas.1} parent=1 // pred_check
      _
    $region23: #{forward_pallas.1} parent=1 // pred_check_branch
      %85 = sbr.rel (0) target = $region25
    $region24: #{forward_pallas.1} parent=1 // pred_region
      _
    $region25: #{forward_pallas.1} parent=1 // pred_fallthru
      _
    // Predicated region
    $region26: #{forward_pallas.1} parent=1 // pred_check
      _
    $region27: #{forward_pallas.1} parent=1 // pred_check_branch
      %87 = sbr.rel (0) target = $region29
    $region28: #{forward_pallas.1} parent=1 // pred_region
      _
    $region29: #{forward_pallas.1} parent=1 // pred_fallthru
      _
    // Predicated region
    $region30: #{forward_pallas.1} parent=1 // pred_check
      _
    $region31: #{forward_pallas.1} parent=1 // pred_check_branch
      %89 = sbr.rel (0) target = $region33
    $region32: #{forward_pallas.1} parent=1 // pred_region
      _
    $region33: #{forward_pallas.1} parent=1 // pred_fallthru
      _
    // Predicated region
    $region34: #{forward_pallas.1} parent=1 // pred_check
      _
    $region35: #{forward_pallas.1} parent=1 // pred_check_branch
      %91 = sbr.rel (0) target = $region37
    $region36: #{forward_pallas.1} parent=1 // pred_region
      _
    $region37: #{forward_pallas.1} parent=1 // pred_fallthru
      _
    // Predicated region
    $region38: #{forward_pallas.1} parent=1 // pred_check
      _
    $region39: #{forward_pallas.1} parent=1 // pred_check_branch
      %93 = sbr.rel (0) target = $region41
    $region40: #{forward_pallas.1} parent=1 // pred_region
      %s95 = ssub.s32 512, 512
      %96 = vsyncadd [#allocation9], %s95
      %s97 = sshll.u32 [#allocation10], 4
      %s98 = int_to_ptr.vmem [resolvable:$true] %s97
      %103 = dma.hbm_to_vmem [thread:$0]  %s9, 512, %s98, [#allocation9], 128, 128, 8
    $region41: #{forward_pallas.1} parent=1 // pred_fallthru
      _
    // Predicated region
    $region42: #{forward_pallas.1} parent=1 // pred_check
      _
    $region43: #{forward_pallas.1} parent=1 // pred_check_branch
      %105 = sbr.rel (0) target = $region45
    $region44: #{forward_pallas.1} parent=1 // pred_region
      %s107 = ssub.s32 512, 512
      %108 = vsyncadd [#allocation12], %s107
      %s109 = sshll.u32 [#allocation11], 4
      %s110 = int_to_ptr.vmem [resolvable:$true] %s109
      %115 = dma.hbm_to_vmem [thread:$0]  %s10, 512, %s110, [#allocation12], 128, 128, 8
    $region45: #{forward_pallas.1} parent=1 // pred_fallthru
      _
    // Predicated region
    $region46: #{forward_pallas.1} parent=1 // pred_check
      _
    $region47: #{forward_pallas.1} parent=1 // pred_check_branch
      %117 = sbr.rel (0) target = $region49
    $region48: #{forward_pallas.1} parent=1 // pred_region
      %s119 = ssub.s32 16, 16
      %120 = vsyncadd [#allocation12], %s119
      %s122 = sshll.u32 [#allocation13], 4
      %s123 = int_to_ptr.vmem [resolvable:$true] %s122
      %125 = dma.hbm_to_vmem [thread:$0]  %s11, 16, %s123, [#allocation12]
    $region49: #{forward_pallas.1} parent=1 // pred_fallthru
      _
    // Predicated region
    $region50: #{forward_pallas.1} parent=1 // pred_check
      _
    $region51: #{forward_pallas.1} parent=1 // pred_check_branch
      %127 = sbr.rel (0) target = $region53
    $region52: #{forward_pallas.1} parent=1 // pred_region
      %s129 = ssub.s32 1024, 1024
      %130 = vsyncadd [#allocation15], %s129
      %s131 = sshll.u32 [#allocation14], 4
      %s132 = int_to_ptr.vmem [resolvable:$true] %s131
      %137 = dma.hbm_to_vmem [thread:$0]  %s12, 1024, %s132, [#allocation15], 128, 128, 8
    $region53: #{forward_pallas.1} parent=1 // pred_fallthru
      _
    // Predicated region
    $region54: #{forward_pallas.1} parent=1 // pred_check
      _
    $region55: #{forward_pallas.1} parent=1 // pred_check_branch
      %139 = sbr.rel (0) target = $region57
    $region56: #{forward_pallas.1} parent=1 // pred_region
      %s141 = ssub.s32 16, 16
      %142 = vsyncadd [#allocation15], %s141
      %s144 = sshll.u32 [#allocation16], 4
      %s145 = int_to_ptr.vmem [resolvable:$true] %s144
      %147 = dma.hbm_to_vmem [thread:$0]  %s13, 16, %s145, [#allocation15]
    $region57: #{forward_pallas.1} parent=1 // pred_fallthru
      _
    // Predicated region
    $region58: #{forward_pallas.1} parent=1 // pred_check
      _
    $region59: #{forward_pallas.1} parent=1 // pred_check_branch
      %149 = sbr.rel (0) target = $region61
    $region60: #{forward_pallas.1} parent=1 // pred_region
      _
    $region61: #{forward_pallas.1} parent=1 // pred_fallthru
      _
    // Predicated region
    $region62: #{forward_pallas.1} parent=1 // pred_check
      _
    $region63: #{forward_pallas.1} parent=1 // pred_check_branch
      %151 = sbr.rel (0) target = $region65
    $region64: #{forward_pallas.1} parent=1 // pred_region
      %s153 = ssub.s32 512, 512
      %154 = vsyncadd [#allocation18], %s153
      %s155 = sshll.u32 [#allocation17], 4
      %s156 = int_to_ptr.vmem [resolvable:$true] %s155
      %161 = dma.hbm_to_vmem [thread:$0]  %s15, 512, %s156, [#allocation18], 128, 128, 8
    $region65: #{forward_pallas.1} parent=1 // pred_fallthru
      _
    // Predicated region
    $region66: #{forward_pallas.1} parent=1 // pred_check
      _
    $region67: #{forward_pallas.1} parent=1 // pred_check_branch
      %163 = sbr.rel (0) target = $region69
    $region68: #{forward_pallas.1} parent=1 // pred_region
      %s165 = ssub.s32 512, 512
      %166 = vsyncadd [#allocation18], %s165
      %s167 = sshll.u32 [#allocation19], 4
      %s168 = int_to_ptr.vmem [resolvable:$true] %s167
      %173 = dma.hbm_to_vmem [thread:$0]  %s16, 512, %s168, [#allocation18], 128, 128, 8
    $region69: #{forward_pallas.1} parent=1 // pred_fallthru
      _
    // Predicated region
    $region70: #{forward_pallas.1} parent=1 // pred_check
      _
    $region71: #{forward_pallas.1} parent=1 // pred_check_branch
      %175 = sbr.rel (0) target = $region73
    $region72: #{forward_pallas.1} parent=1 // pred_region
      %s177 = ssub.s32 512, 512
      %178 = vsyncadd [#allocation21], %s177
      %s179 = sshll.u32 [#allocation20], 4
      %s180 = int_to_ptr.vmem [resolvable:$true] %s179
      %185 = dma.hbm_to_vmem [thread:$0]  %s17, 512, %s180, [#allocation21], 128, 128, 8
    $region73: #{forward_pallas.1} parent=1 // pred_fallthru
      _
    // Predicated region
    $region74: #{forward_pallas.1} parent=1 // pred_check
      _
    $region75: #{forward_pallas.1} parent=1 // pred_check_branch
      %187 = sbr.rel (0) target = $region77
    $region76: #{forward_pallas.1} parent=1 // pred_region
      %s189 = ssub.s32 16, 16
      %190 = vsyncadd [#allocation21], %s189
      %s192 = sshll.u32 [#allocation22], 4
      %s193 = int_to_ptr.vmem [resolvable:$true] %s192
      %195 = dma.hbm_to_vmem [thread:$0]  %s18, 16, %s193, [#allocation21]
    $region77: #{forward_pallas.1} parent=1 // pred_fallthru
      _
    // Predicated region
    $region78: #{forward_pallas.1} parent=1 // pred_check
      _
    $region79: #{forward_pallas.1} parent=1 // pred_check_branch
      %197 = sbr.rel (0) target = $region81
    $region80: #{forward_pallas.1} parent=1 // pred_region
      %s199 = ssub.s32 512, 512
      %200 = vsyncadd [#allocation24], %s199
      %s201 = sshll.u32 [#allocation23], 4
      %s202 = int_to_ptr.vmem [resolvable:$true] %s201
      %207 = dma.hbm_to_vmem [thread:$0]  %s19, 512, %s202, [#allocation24], 128, 128, 8
    $region81: #{forward_pallas.1} parent=1 // pred_fallthru
      _
    // Predicated region
    $region82: #{forward_pallas.1} parent=1 // pred_check
      _
    $region83: #{forward_pallas.1} parent=1 // pred_check_branch
      %209 = sbr.rel (0) target = $region85
    $region84: #{forward_pallas.1} parent=1 // pred_region
      %s211 = ssub.s32 16, 16
      %212 = vsyncadd [#allocation24], %s211
      %s214 = sshll.u32 [#allocation25], 4
      %s215 = int_to_ptr.vmem [resolvable:$true] %s214
      %217 = dma.hbm_to_vmem [thread:$0]  %s20, 16, %s215, [#allocation24]
    $region85: #{forward_pallas.1} parent=1 // pred_fallthru
      _
    // Predicated region
    $region86: #{forward_pallas.1} parent=1 // pred_check
      _
    $region87: #{forward_pallas.1} parent=1 // pred_check_branch
      %219 = sbr.rel (0) target = $region89
    $region88: #{forward_pallas.1} parent=1 // pred_region
      %220 = dma.done [#allocation4], 384
    $region89: #{forward_pallas.1} parent=1 // pred_fallthru
      _
    // Predicated region
    $region90: #{forward_pallas.1} parent=1 // pred_check
      _
    $region91: #{forward_pallas.1} parent=1 // pred_check_branch
      %222 = sbr.rel (0) target = $region93
    $region92: #{forward_pallas.1} parent=1 // pred_region
      %223 = dma.done [#allocation6], 384
    $region93: #{forward_pallas.1} parent=1 // pred_fallthru
      _
    // Predicated region
    $region94: #{forward_pallas.1} parent=1 // pred_check
      _
    $region95: #{forward_pallas.1} parent=1 // pred_check_branch
      %225 = sbr.rel (0) target = $region97
    $region96: #{forward_pallas.1} parent=1 // pred_region
      %226 = dma.done [#allocation6], 384
    $region97: #{forward_pallas.1} parent=1 // pred_fallthru
      _
    // Predicated region
    $region98: #{forward_pallas.1} parent=1 // pred_check
      _
    $region99: #{forward_pallas.1} parent=1 // pred_check_branch
      %228 = sbr.rel (0) target = $region101
    $region100: #{forward_pallas.1} parent=1 // pred_region
      %229 = dma.done [#allocation9], 384
    $region101: #{forward_pallas.1} parent=1 // pred_fallthru
      _
    // Predicated region
    $region102: #{forward_pallas.1} parent=1 // pred_check
      _
    $region103: #{forward_pallas.1} parent=1 // pred_check_branch
      %231 = sbr.rel (0) target = $region105
    $region104: #{forward_pallas.1} parent=1 // pred_region
      %232 = dma.done [#allocation9], 512
    $region105: #{forward_pallas.1} parent=1 // pred_fallthru
      _
    // Predicated region
    $region106: #{forward_pallas.1} parent=1 // pred_check
      _
    $region107: #{forward_pallas.1} parent=1 // pred_check_branch
      %234 = sbr.rel (0) target = $region109
    $region108: #{forward_pallas.1} parent=1 // pred_region
      %235 = dma.done [#allocation12], 512
    $region109: #{forward_pallas.1} parent=1 // pred_fallthru
      _
    // Predicated region
    $region110: #{forward_pallas.1} parent=1 // pred_check
      _
    $region111: #{forward_pallas.1} parent=1 // pred_check_branch
      %237 = sbr.rel (0) target = $region113
    $region112: #{forward_pallas.1} parent=1 // pred_region
      %238 = dma.done [#allocation12], 16
    $region113: #{forward_pallas.1} parent=1 // pred_fallthru
      _
    // Predicated region
    $region114: #{forward_pallas.1} parent=1 // pred_check
      _
    $region115: #{forward_pallas.1} parent=1 // pred_check_branch
      %240 = sbr.rel (0) target = $region117
    $region116: #{forward_pallas.1} parent=1 // pred_region
      %241 = dma.done [#allocation15], 1024
    $region117: #{forward_pallas.1} parent=1 // pred_fallthru
      _
    // Predicated region
    $region118: #{forward_pallas.1} parent=1 // pred_check
      _
    $region119: #{forward_pallas.1} parent=1 // pred_check_branch
      %243 = sbr.rel (0) target = $region121
    $region120: #{forward_pallas.1} parent=1 // pred_region
      %244 = dma.done [#allocation15], 16
    $region121: #{forward_pallas.1} parent=1 // pred_fallthru
      _
    // Predicated region
    $region122: #{forward_pallas.1} parent=1 // pred_check
      _
    $region123: #{forward_pallas.1} parent=1 // pred_check_branch
      %246 = sbr.rel (0) target = $region125
    $region124: #{forward_pallas.1} parent=1 // pred_region
      %247 = dma.done [#allocation18], 512
    $region125: #{forward_pallas.1} parent=1 // pred_fallthru
      _
    // Predicated region
    $region126: #{forward_pallas.1} parent=1 // pred_check
      _
    $region127: #{forward_pallas.1} parent=1 // pred_check_branch
      %249 = sbr.rel (0) target = $region129
    $region128: #{forward_pallas.1} parent=1 // pred_region
      %250 = dma.done [#allocation18], 512
    $region129: #{forward_pallas.1} parent=1 // pred_fallthru
      _
    // Predicated region
    $region130: #{forward_pallas.1} parent=1 // pred_check
      _
    $region131: #{forward_pallas.1} parent=1 // pred_check_branch
      %252 = sbr.rel (0) target = $region133
    $region132: #{forward_pallas.1} parent=1 // pred_region
      %253 = dma.done [#allocation21], 512
    $region133: #{forward_pallas.1} parent=1 // pred_fallthru
      _
    // Predicated region
    $region134: #{forward_pallas.1} parent=1 // pred_check
      _
    $region135: #{forward_pallas.1} parent=1 // pred_check_branch
      %255 = sbr.rel (0) target = $region137
    $region136: #{forward_pallas.1} parent=1 // pred_region
      %256 = dma.done [#allocation21], 16
    $region137: #{forward_pallas.1} parent=1 // pred_fallthru
      _
    // Predicated region
    $region138: #{forward_pallas.1} parent=1 // pred_check
      _
    $region139: #{forward_pallas.1} parent=1 // pred_check_branch
      %258 = sbr.rel (0) target = $region141
    $region140: #{forward_pallas.1} parent=1 // pred_region
      %259 = dma.done [#allocation24], 512
    $region141: #{forward_pallas.1} parent=1 // pred_fallthru
      _
    // Predicated region
    $region142: #{forward_pallas.1} parent=1 // pred_check
      _
    $region143: #{forward_pallas.1} parent=1 // pred_check_branch
      %261 = sbr.rel (0) target = $region145
    $region144: #{forward_pallas.1} parent=1 // pred_region
      %262 = dma.done [#allocation24], 16
    $region145: #{forward_pallas.1} parent=1 // pred_fallthru
      _
    %v263 = vld [vmem:[#allocation5] sm:$0xff]
    %v264 = vld [vmem:[#allocation5 + $0x8] sm:$0xff]
    %v265 = vld [vmem:[#allocation5 + $0x10] sm:$0xff]
    %v266 = vld [vmem:[#allocation7] sm:$0xff]
    %v267 = vld [vmem:[#allocation7 + $0x8] sm:$0xff]
    %v268 = vld [vmem:[#allocation7 + $0x10] sm:$0xff]
    %v269 = vld [vmem:[#allocation8] sm:$0xff]
    %v270 = vld [vmem:[#allocation8 + $0x8] sm:$0xff]
    %v271 = vld [vmem:[#allocation8 + $0x10] sm:$0xff]
    %v272 = vld [vmem:[#allocation3] sm:$0xff]
    %v273 = vld [vmem:[#allocation3 + $0x8] sm:$0xff]
    %v274 = vld [vmem:[#allocation3 + $0x10] sm:$0xff]
    %vm275 = vcmask 261120
    %276 = vst.msk [vmem:[#allocation2] sm:$0xff] %vm275, %v272
    %277 = vst.msk [vmem:[#allocation2 + $0x8] sm:$0xff] %vm275, %v273
    %278 = vst.msk [vmem:[#allocation2 + $0x10] sm:$0xff] %vm275, %v274
    %v279 = vld [vmem:[%s1] sm:$0xff]
    %v280 = vld [vmem:[%s1 + $0x8] sm:$0xff]
    %v281 = vld [vmem:[%s1 + $0x10] sm:$0xff]
    %285 = vrot.lane.b32.xlu0 %v279, 32
    %v286 = vpop.permute.xlu0 %285
    %287 = vrot.lane.b32.xlu0 %v280, 32
    %v288 = vpop.permute.xlu0 %287
    %289 = vrot.lane.b32.xlu0 %v281, 32
    %v290 = vpop.permute.xlu0 %289
    %vm294 = vcmask 523520
    %295 = vst.msk [vmem:[#allocation2] sm:$0xff] %vm294, %v286
    %296 = vst.msk [vmem:[#allocation2 + $0x8] sm:$0xff] %vm294, %v288
    %297 = vst.msk [vmem:[#allocation2 + $0x10] sm:$0xff] %vm294, %v290
    %v298 = vld [vmem:[#allocation2] sm:$0xff]
    %v299 = vld [vmem:[#allocation2 + $0x8] sm:$0xff]
    %v300 = vld [vmem:[#allocation2 + $0x10] sm:$0xff]
    %v301 = vld [vmem:[%s5] sm:$0xff]
    %v302 = vld [vmem:[%s5 + $0x8] sm:$0xff]
    %v303 = vld [vmem:[%s5 + $0x10] sm:$0xff]
    %v304 = vld [vmem:[%s5 + $0x18] sm:$0xff]
    %v305 = vld [vmem:[%s5 + $0x20] sm:$0xff]
    %v306 = vld [vmem:[%s5 + $0x28] sm:$0xff]
    %v307 = vld [vmem:[%s5 + $0x30] sm:$0xff]
    %v308 = vld [vmem:[%s5 + $0x38] sm:$0xff]
    %v309 = vld [vmem:[%s6] sm:$0x1]
    %v311 = vlaneseq
    %v312 = vshrl.u32 %v311, 7
    %v313 = vsub.s32 0, %v312
    %v314 = vrot.slane %v309, %v313
    %vm316 = vcmask 523264
    %v318 = vsel %vm316, %v298, 0
    %v321 = vsel %vm316, %v299, 0
    %v324 = vsel %vm316, %v300, 0
    %326 = vmatprep.subr.mxu0 0.0
    %327 = vmatpush1.msra.mxu0 %v301
    %328 = vmatprep.subr.mxu0 0.0
    %329 = vmatpush1.msra.mxu0 %v302
    %330 = vmatprep.subr.mxu0 0.0
    %331 = vmatpush1.msra.mxu0 %v303
    %332 = vmatprep.subr.mxu0 0.0
    %333 = vmatpush1.msra.mxu0 %v304
    %334 = vmatprep.subr.mxu0 0.0
    %335 = vmatpush1.msra.mxu0 %v305
    %336 = vmatprep.subr.mxu0 0.0
    %337 = vmatpush1.msra.mxu0 %v306
    %338 = vmatprep.subr.mxu0 0.0
    %339 = vmatpush1.msra.mxu0 %v307
    %340 = vmatprep.subr.mxu0 0.0
    %341 = vmatpush1.msra.mxu0 %v308
    %342 = vmatprep.subr.mxu0 0.0
    %343 = vmatpush1.msra.mxu0 0.0
    %344 = vmatprep.subr.mxu0 0.0
    %345 = vmatpush1.msra.mxu0 0.0
    %346 = vmatprep.subr.mxu0 0.0
    %347 = vmatpush1.msra.mxu0 0.0
    %348 = vmatprep.subr.mxu0 0.0
    %349 = vmatpush1.msra.mxu0 0.0
    %350 = vmatprep.subr.mxu0 0.0
    %351 = vmatpush1.msra.mxu0 0.0
    %352 = vmatprep.subr.mxu0 0.0
    %353 = vmatpush1.msra.mxu0 0.0
    %354 = vmatprep.subr.mxu0 0.0
    %355 = vmatpush1.msra.mxu0 0.0
    %356 = vmatprep.subr.mxu0 0.0
    %357 = vmatpush1.msra.mxu0 0.0
    %358 = vmatprep.subr.mxu0 0.0
    %359 = vmatpush1.msra.mxu0 0.0
    %360 = vmatprep.subr.mxu0 0.0
    %361 = vmatpush1.msra.mxu0 0.0
    %362 = vmatprep.subr.mxu0 0.0
    %363 = vmatpush1.msra.mxu0 0.0
    %364 = vmatprep.subr.mxu0 0.0
    %365 = vmatpush1.msra.mxu0 0.0
    %366 = vmatprep.subr.mxu0 0.0
    %367 = vmatpush1.msra.mxu0 0.0
    %368 = vmatprep.subr.mxu0 0.0
    %369 = vmatpush1.msra.mxu0 0.0
    %370 = vmatprep.subr.mxu0 0.0
    %371 = vmatpush1.msra.mxu0 0.0
    %372 = vmatprep.subr.mxu0 0.0
    %373 = vmatpush1.msra.mxu0 0.0
    %374 = vmatprep.subr.mxu0 0.0
    %375 = vmatpush1.msra.mxu0 0.0
    %376 = vmatprep.subr.mxu0 0.0
    %377 = vmatpush1.msra.mxu0 0.0
    %378 = vmatprep.subr.mxu0 0.0
    %379 = vmatpush1.msra.mxu0 0.0
    %380 = vmatprep.subr.mxu0 0.0
    %381 = vmatpush1.msra.mxu0 0.0
    %382 = vmatprep.subr.mxu0 0.0
    %383 = vmatpush1.msra.mxu0 0.0
    %384 = vmatprep.subr.mxu0 0.0
    %385 = vmatpush1.msra.mxu0 0.0
    %386 = vmatprep.subr.mxu0 0.0
    %387 = vmatpush1.msra.mxu0 0.0
    %388 = vmatprep.subr.mxu0 0.0
    %389 = vmatpush1.msra.mxu0 0.0
    %390 = vmatprep.mubr.f32.mxu0 0.0
    %391 = vmatmul.mubr.f32.gmra.mrb[0].mxu0 %v318
    %v392 = vpop.f32.mrb[0].mxu0
    %v393 = vadd.f32 %v314, %v392
    %v394 = vpop.f32.mrb[0].mxu0
    %395 = vmatprep.mubr.f32.mxu0 0.0
    %396 = vmatmul.mubr.f32.gmra.mrb[0].mxu0 %v321
    %v397 = vpop.f32.mrb[0].mxu0
    %v398 = vadd.f32 %v314, %v397
    %v399 = vpop.f32.mrb[0].mxu0
    %400 = vmatprep.mubr.f32.mxu0 0.0
    %401 = vmatmul.mubr.f32.gmra.mrb[0].mxu0 %v324
    %v402 = vpop.f32.mrb[0].mxu0
    %v403 = vadd.f32 %v314, %v402
    %v404 = vpop.f32.mrb[0].mxu0
    %405 = vdwg.mxu0
    %vm406 = vcmask 195584
    %v408 = vsel %vm406, %v263, 0
    %v411 = vsel %vm406, %v264, 0
    %v414 = vsel %vm406, %v265, 0
    %416 = vmatprep.subr.mxu0 0.0
    %417 = vmatpush1.msra.mxu0 %v393
    %418 = vmatprep.subr.mxu0 0.0
    %419 = vmatpush1.msra.mxu0 %v398
    %420 = vmatprep.subr.mxu0 0.0
    %421 = vmatpush1.msra.mxu0 %v403
    %422 = vmatprep.subr.mxu0 0.0
    %423 = vmatpush1.msra.mxu0 0.0
    %424 = vmatprep.subr.mxu0 0.0
    %425 = vmatpush1.msra.mxu0 0.0
    %426 = vmatprep.subr.mxu0 0.0
    %427 = vmatpush1.msra.mxu0 0.0
    %428 = vmatprep.subr.mxu0 0.0
    %429 = vmatpush1.msra.mxu0 0.0
    %430 = vmatprep.subr.mxu0 0.0
    %431 = vmatpush1.msra.mxu0 0.0
    %432 = vmatprep.subr.mxu0 0.0
    %433 = vmatpush1.msra.mxu0 0.0
    %434 = vmatprep.subr.mxu0 0.0
    %435 = vmatpush1.msra.mxu0 0.0
    %436 = vmatprep.subr.mxu0 0.0
    %437 = vmatpush1.msra.mxu0 0.0
    %438 = vmatprep.subr.mxu0 0.0
    %439 = vmatpush1.msra.mxu0 0.0
    %440 = vmatprep.subr.mxu0 0.0
    %441 = vmatpush1.msra.mxu0 0.0
    %442 = vmatprep.subr.mxu0 0.0
    %443 = vmatpush1.msra.mxu0 0.0
    %444 = vmatprep.subr.mxu0 0.0
    %445 = vmatpush1.msra.mxu0 0.0
    %446 = vmatprep.subr.mxu0 0.0
    %447 = vmatpush1.msra.mxu0 0.0
    %448 = vmatprep.subr.mxu0 0.0
    %449 = vmatpush1.msra.mxu0 0.0
    %450 = vmatprep.subr.mxu0 0.0
    %451 = vmatpush1.msra.mxu0 0.0
    %452 = vmatprep.subr.mxu0 0.0
    %453 = vmatpush1.msra.mxu0 0.0
    %454 = vmatprep.subr.mxu0 0.0
    %455 = vmatpush1.msra.mxu0 0.0
    %456 = vmatprep.subr.mxu0 0.0
    %457 = vmatpush1.msra.mxu0 0.0
    %458 = vmatprep.subr.mxu0 0.0
    %459 = vmatpush1.msra.mxu0 0.0
    %460 = vmatprep.subr.mxu0 0.0
    %461 = vmatpush1.msra.mxu0 0.0
    %462 = vmatprep.subr.mxu0 0.0
    %463 = vmatpush1.msra.mxu0 0.0
    %464 = vmatprep.subr.mxu0 0.0
    %465 = vmatpush1.msra.mxu0 0.0
    %466 = vmatprep.subr.mxu0 0.0
    %467 = vmatpush1.msra.mxu0 0.0
    %468 = vmatprep.subr.mxu0 0.0
    %469 = vmatpush1.msra.mxu0 0.0
    %470 = vmatprep.subr.mxu0 0.0
    %471 = vmatpush1.msra.mxu0 0.0
    %472 = vmatprep.subr.mxu0 0.0
    %473 = vmatpush1.msra.mxu0 0.0
    %474 = vmatprep.subr.mxu0 0.0
    %475 = vmatpush1.msra.mxu0 0.0
    %476 = vmatprep.subr.mxu0 0.0
    %477 = vmatpush1.msra.mxu0 0.0
    %478 = vmatprep.subr.mxu0 0.0
    %479 = vmatpush1.msra.mxu0 0.0
    %480 = vmatprep.mubr.f32.mxu0 0.0
    %481 = vmatmul.mubr.f32.gmra.mrb[0].mxu0 %v408
    %v482 = vpop.f32.mrb[0].mxu0
    %v483 = vadd.f32 0.0, %v482
    %v484 = vpop.f32.mrb[0].mxu0
    %485 = vmatprep.mubr.f32.mxu0 0.0
    %486 = vmatmul.mubr.f32.gmra.mrb[0].mxu0 %v411
    %v487 = vpop.f32.mrb[0].mxu0
    %v488 = vadd.f32 0.0, %v487
    %v489 = vpop.f32.mrb[0].mxu0
    %490 = vmatprep.mubr.f32.mxu0 0.0
    %491 = vmatmul.mubr.f32.gmra.mrb[0].mxu0 %v414
    %v492 = vpop.f32.mrb[0].mxu0
    %v493 = vadd.f32 0.0, %v492
    %v494 = vpop.f32.mrb[0].mxu0
    %495 = vdwg.mxu0
    %499 = vrot.lane.b32.xlu0 %v393, 96
    %v500 = vpop.permute.xlu0 %499
    %501 = vrot.lane.b32.xlu0 %v398, 96
    %v502 = vpop.permute.xlu0 %501
    %503 = vrot.lane.b32.xlu0 %v403, 96
    %v504 = vpop.permute.xlu0 %503
    %v509 = vsel %vm406, %v266, 0
    %v512 = vsel %vm406, %v267, 0
    %v515 = vsel %vm406, %v268, 0
    %517 = vmatprep.subr.mxu0 0.0
    %518 = vmatpush1.msra.mxu0 %v500
    %519 = vmatprep.subr.mxu0 0.0
    %520 = vmatpush1.msra.mxu0 %v502
    %521 = vmatprep.subr.mxu0 0.0
    %522 = vmatpush1.msra.mxu0 %v504
    %523 = vmatprep.subr.mxu0 0.0
    %524 = vmatpush1.msra.mxu0 0.0
    %525 = vmatprep.subr.mxu0 0.0
    %526 = vmatpush1.msra.mxu0 0.0
    %527 = vmatprep.subr.mxu0 0.0
    %528 = vmatpush1.msra.mxu0 0.0
    %529 = vmatprep.subr.mxu0 0.0
    %530 = vmatpush1.msra.mxu0 0.0
    %531 = vmatprep.subr.mxu0 0.0
    %532 = vmatpush1.msra.mxu0 0.0
    %533 = vmatprep.subr.mxu0 0.0
    %534 = vmatpush1.msra.mxu0 0.0
    %535 = vmatprep.subr.mxu0 0.0
    %536 = vmatpush1.msra.mxu0 0.0
    %537 = vmatprep.subr.mxu0 0.0
    %538 = vmatpush1.msra.mxu0 0.0
    %539 = vmatprep.subr.mxu0 0.0
    %540 = vmatpush1.msra.mxu0 0.0
    %541 = vmatprep.subr.mxu0 0.0
    %542 = vmatpush1.msra.mxu0 0.0
    %543 = vmatprep.subr.mxu0 0.0
    %544 = vmatpush1.msra.mxu0 0.0
    %545 = vmatprep.subr.mxu0 0.0
    %546 = vmatpush1.msra.mxu0 0.0
    %547 = vmatprep.subr.mxu0 0.0
    %548 = vmatpush1.msra.mxu0 0.0
    %549 = vmatprep.subr.mxu0 0.0
    %550 = vmatpush1.msra.mxu0 0.0
    %551 = vmatprep.subr.mxu0 0.0
    %552 = vmatpush1.msra.mxu0 0.0
    %553 = vmatprep.subr.mxu0 0.0
    %554 = vmatpush1.msra.mxu0 0.0
    %555 = vmatprep.subr.mxu0 0.0
    %556 = vmatpush1.msra.mxu0 0.0
    %557 = vmatprep.subr.mxu0 0.0
    %558 = vmatpush1.msra.mxu0 0.0
    %559 = vmatprep.subr.mxu0 0.0
    %560 = vmatpush1.msra.mxu0 0.0
    %561 = vmatprep.subr.mxu0 0.0
    %562 = vmatpush1.msra.mxu0 0.0
    %563 = vmatprep.subr.mxu0 0.0
    %564 = vmatpush1.msra.mxu0 0.0
    %565 = vmatprep.subr.mxu0 0.0
    %566 = vmatpush1.msra.mxu0 0.0
    %567 = vmatprep.subr.mxu0 0.0
    %568 = vmatpush1.msra.mxu0 0.0
    %569 = vmatprep.subr.mxu0 0.0
    %570 = vmatpush1.msra.mxu0 0.0
    %571 = vmatprep.subr.mxu0 0.0
    %572 = vmatpush1.msra.mxu0 0.0
    %573 = vmatprep.subr.mxu0 0.0
    %574 = vmatpush1.msra.mxu0 0.0
    %575 = vmatprep.subr.mxu0 0.0
    %576 = vmatpush1.msra.mxu0 0.0
    %577 = vmatprep.subr.mxu0 0.0
    %578 = vmatpush1.msra.mxu0 0.0
    %579 = vmatprep.subr.mxu0 0.0
    %580 = vmatpush1.msra.mxu0 0.0
    %581 = vmatprep.mubr.f32.mxu0 0.0
    %582 = vmatmul.mubr.f32.gmra.mrb[0].mxu0 %v509
    %v583 = vpop.f32.mrb[0].mxu0
    %v584 = vadd.f32 0.0, %v583
    %v585 = vpop.f32.mrb[0].mxu0
    %586 = vmatprep.mubr.f32.mxu0 0.0
    %587 = vmatmul.mubr.f32.gmra.mrb[0].mxu0 %v512
    %v588 = vpop.f32.mrb[0].mxu0
    %v589 = vadd.f32 0.0, %v588
    %v590 = vpop.f32.mrb[0].mxu0
    %591 = vmatprep.mubr.f32.mxu0 0.0
    %592 = vmatmul.mubr.f32.gmra.mrb[0].mxu0 %v515
    %v593 = vpop.f32.mrb[0].mxu0
    %v594 = vadd.f32 0.0, %v593
    %v595 = vpop.f32.mrb[0].mxu0
    %596 = vdwg.mxu0
    %v598 = vsel %vm406, %v269, 0
    %v601 = vsel %vm406, %v270, 0
    %v604 = vsel %vm406, %v271, 0
    %606 = vmatprep.subr.mxu0 0.0
    %607 = vmatpush1.msra.mxu0 %v393
    %608 = vmatprep.subr.mxu0 0.0
    %609 = vmatpush1.msra.mxu0 %v398
    %610 = vmatprep.subr.mxu0 0.0
    %611 = vmatpush1.msra.mxu0 %v403
    %612 = vmatprep.subr.mxu0 0.0
    %613 = vmatpush1.msra.mxu0 0.0
    %614 = vmatprep.subr.mxu0 0.0
    %615 = vmatpush1.msra.mxu0 0.0
    %616 = vmatprep.subr.mxu0 0.0
    %617 = vmatpush1.msra.mxu0 0.0
    %618 = vmatprep.subr.mxu0 0.0
    %619 = vmatpush1.msra.mxu0 0.0
    %620 = vmatprep.subr.mxu0 0.0
    %621 = vmatpush1.msra.mxu0 0.0
    %622 = vmatprep.subr.mxu0 0.0
    %623 = vmatpush1.msra.mxu0 0.0
    %624 = vmatprep.subr.mxu0 0.0
    %625 = vmatpush1.msra.mxu0 0.0
    %626 = vmatprep.subr.mxu0 0.0
    %627 = vmatpush1.msra.mxu0 0.0
    %628 = vmatprep.subr.mxu0 0.0
    %629 = vmatpush1.msra.mxu0 0.0
    %630 = vmatprep.subr.mxu0 0.0
    %631 = vmatpush1.msra.mxu0 0.0
    %632 = vmatprep.subr.mxu0 0.0
    %633 = vmatpush1.msra.mxu0 0.0
    %634 = vmatprep.subr.mxu0 0.0
    %635 = vmatpush1.msra.mxu0 0.0
    %636 = vmatprep.subr.mxu0 0.0
    %637 = vmatpush1.msra.mxu0 0.0
    %638 = vmatprep.subr.mxu0 0.0
    %639 = vmatpush1.msra.mxu0 0.0
    %640 = vmatprep.subr.mxu0 0.0
    %641 = vmatpush1.msra.mxu0 0.0
    %642 = vmatprep.subr.mxu0 0.0
    %643 = vmatpush1.msra.mxu0 0.0
    %644 = vmatprep.subr.mxu0 0.0
    %645 = vmatpush1.msra.mxu0 0.0
    %646 = vmatprep.subr.mxu0 0.0
    %647 = vmatpush1.msra.mxu0 0.0
    %648 = vmatprep.subr.mxu0 0.0
    %649 = vmatpush1.msra.mxu0 0.0
    %650 = vmatprep.subr.mxu0 0.0
    %651 = vmatpush1.msra.mxu0 0.0
    %652 = vmatprep.subr.mxu0 0.0
    %653 = vmatpush1.msra.mxu0 0.0
    %654 = vmatprep.subr.mxu0 0.0
    %655 = vmatpush1.msra.mxu0 0.0
    %656 = vmatprep.subr.mxu0 0.0
    %657 = vmatpush1.msra.mxu0 0.0
    %658 = vmatprep.subr.mxu0 0.0
    %659 = vmatpush1.msra.mxu0 0.0
    %660 = vmatprep.subr.mxu0 0.0
    %661 = vmatpush1.msra.mxu0 0.0
    %662 = vmatprep.subr.mxu0 0.0
    %663 = vmatpush1.msra.mxu0 0.0
    %664 = vmatprep.subr.mxu0 0.0
    %665 = vmatpush1.msra.mxu0 0.0
    %666 = vmatprep.subr.mxu0 0.0
    %667 = vmatpush1.msra.mxu0 0.0
    %668 = vmatprep.subr.mxu0 0.0
    %669 = vmatpush1.msra.mxu0 0.0
    %670 = vmatprep.mubr.f32.mxu0 0.0
    %671 = vmatmul.mubr.f32.gmra.mrb[0].mxu0 %v598
    %v672 = vpop.f32.mrb[0].mxu0
    %v673 = vadd.f32 0.0, %v672
    %v674 = vpop.f32.mrb[0].mxu0
    %675 = vmatprep.mubr.f32.mxu0 0.0
    %676 = vmatmul.mubr.f32.gmra.mrb[0].mxu0 %v601
    %v677 = vpop.f32.mrb[0].mxu0
    %v678 = vadd.f32 0.0, %v677
    %v679 = vpop.f32.mrb[0].mxu0
    %680 = vmatprep.mubr.f32.mxu0 0.0
    %681 = vmatmul.mubr.f32.gmra.mrb[0].mxu0 %v604
    %v682 = vpop.f32.mrb[0].mxu0
    %v683 = vadd.f32 0.0, %v682
    %v684 = vpop.f32.mrb[0].mxu0
    %685 = vdwg.mxu0
    %v686 = vld [vmem:[%s7] sm:$0xff]
    %v687 = vld [vmem:[%s7 + $0x8] sm:$0xff]
    %v688 = vld [vmem:[%s7 + $0x10] sm:$0xff]
    %v689 = vld [vmem:[%s7 + $0x18] sm:$0xff]
    %v690 = vld [vmem:[%s7 + $0x20] sm:$0xff]
    %v691 = vld [vmem:[%s7 + $0x28] sm:$0xff]
    %v692 = vld [vmem:[%s7 + $0x30] sm:$0xff]
    %v693 = vld [vmem:[%s7 + $0x38] sm:$0xff]
    %v694 = vld [vmem:[%s8] sm:$0xff]
    %v695 = vld [vmem:[%s8 + $0x8] sm:$0xff]
    %v696 = vld [vmem:[%s8 + $0x10] sm:$0xff]
    %v697 = vld [vmem:[%s8 + $0x18] sm:$0xff]
    %v699 = vsel %vm275, %v483, 0
    %v702 = vsel %vm275, %v488, 0
    %v705 = vsel %vm275, %v493, 0
    %707 = vmatprep.subr.mxu0 0.0
    %708 = vmatpush1.msra.mxu0 %v694
    %709 = vmatprep.subr.mxu0 0.0
    %710 = vmatpush1.msra.mxu0 %v695
    %711 = vmatprep.subr.mxu0 0.0
    %712 = vmatpush1.msra.mxu0 %v696
    %713 = vmatprep.subr.mxu0 0.0
    %714 = vmatpush1.msra.mxu0 %v697
    %715 = vmatprep.subr.mxu0 0.0
    %716 = vmatpush1.msra.mxu0 0.0
    %717 = vmatprep.subr.mxu0 0.0
    %718 = vmatpush1.msra.mxu0 0.0
    %719 = vmatprep.subr.mxu0 0.0
    %720 = vmatpush1.msra.mxu0 0.0
    %721 = vmatprep.subr.mxu0 0.0
    %722 = vmatpush1.msra.mxu0 0.0
    %723 = vmatprep.subr.mxu0 0.0
    %724 = vmatpush1.msra.mxu0 0.0
    %725 = vmatprep.subr.mxu0 0.0
    %726 = vmatpush1.msra.mxu0 0.0
    %727 = vmatprep.subr.mxu0 0.0
    %728 = vmatpush1.msra.mxu0 0.0
    %729 = vmatprep.subr.mxu0 0.0
    %730 = vmatpush1.msra.mxu0 0.0
    %731 = vmatprep.subr.mxu0 0.0
    %732 = vmatpush1.msra.mxu0 0.0
    %733 = vmatprep.subr.mxu0 0.0
    %734 = vmatpush1.msra.mxu0 0.0
    %735 = vmatprep.subr.mxu0 0.0
    %736 = vmatpush1.msra.mxu0 0.0
    %737 = vmatprep.subr.mxu0 0.0
    %738 = vmatpush1.msra.mxu0 0.0
    %739 = vmatprep.subr.mxu0 0.0
    %740 = vmatpush1.msra.mxu0 0.0
    %741 = vmatprep.subr.mxu0 0.0
    %742 = vmatpush1.msra.mxu0 0.0
    %743 = vmatprep.subr.mxu0 0.0
    %744 = vmatpush1.msra.mxu0 0.0
    %745 = vmatprep.subr.mxu0 0.0
    %746 = vmatpush1.msra.mxu0 0.0
    %747 = vmatprep.subr.mxu0 0.0
    %748 = vmatpush1.msra.mxu0 0.0
    %749 = vmatprep.subr.mxu0 0.0
    %750 = vmatpush1.msra.mxu0 0.0
    %751 = vmatprep.subr.mxu0 0.0
    %752 = vmatpush1.msra.mxu0 0.0
    %753 = vmatprep.subr.mxu0 0.0
    %754 = vmatpush1.msra.mxu0 0.0
    %755 = vmatprep.subr.mxu0 0.0
    %756 = vmatpush1.msra.mxu0 0.0
    %757 = vmatprep.subr.mxu0 0.0
    %758 = vmatpush1.msra.mxu0 0.0
    %759 = vmatprep.subr.mxu0 0.0
    %760 = vmatpush1.msra.mxu0 0.0
    %761 = vmatprep.subr.mxu0 0.0
    %762 = vmatpush1.msra.mxu0 0.0
    %763 = vmatprep.subr.mxu0 0.0
    %764 = vmatpush1.msra.mxu0 0.0
    %765 = vmatprep.subr.mxu0 0.0
    %766 = vmatpush1.msra.mxu0 0.0
    %767 = vmatprep.subr.mxu0 0.0
    %768 = vmatpush1.msra.mxu0 0.0
    %769 = vmatprep.subr.mxu0 0.0
    %770 = vmatpush1.msra.mxu0 0.0
    %771 = vmatprep.mubr.f32.mxu0 0.0
    %772 = vmatmul.mubr.f32.gmra.mrb[0].mxu0 %v699
    %v773 = vpop.f32.mrb[0].mxu0
    %v774 = vadd.f32 0.0, %v773
    %v775 = vpop.f32.mrb[0].mxu0
    %776 = vmatprep.mubr.f32.mxu0 0.0
    %777 = vmatmul.mubr.f32.gmra.mrb[0].mxu0 %v702
    %v778 = vpop.f32.mrb[0].mxu0
    %v779 = vadd.f32 0.0, %v778
    %v780 = vpop.f32.mrb[0].mxu0
    %781 = vmatprep.mubr.f32.mxu0 0.0
    %782 = vmatmul.mubr.f32.gmra.mrb[0].mxu0 %v705
    %v783 = vpop.f32.mrb[0].mxu0
    %v784 = vadd.f32 0.0, %v783
    %v785 = vpop.f32.mrb[0].mxu0
    %786 = vdwg.mxu0
    %v787 = vsel %vm316, %v393, 0
    %v789 = vsel %vm316, %v398, 0
    %v791 = vsel %vm316, %v403, 0
    %793 = vmatprep.subr.mxu0 0.0
    %794 = vmatpush1.msra.mxu0 %v686
    %795 = vmatprep.subr.mxu0 0.0
    %796 = vmatpush1.msra.mxu0 %v687
    %797 = vmatprep.subr.mxu0 0.0
    %798 = vmatpush1.msra.mxu0 %v688
    %799 = vmatprep.subr.mxu0 0.0
    %800 = vmatpush1.msra.mxu0 %v689
    %801 = vmatprep.subr.mxu0 0.0
    %802 = vmatpush1.msra.mxu0 %v690
    %803 = vmatprep.subr.mxu0 0.0
    %804 = vmatpush1.msra.mxu0 %v691
    %805 = vmatprep.subr.mxu0 0.0
    %806 = vmatpush1.msra.mxu0 %v692
    %807 = vmatprep.subr.mxu0 0.0
    %808 = vmatpush1.msra.mxu0 %v693
    %809 = vmatprep.subr.mxu0 0.0
    %810 = vmatpush1.msra.mxu0 0.0
    %811 = vmatprep.subr.mxu0 0.0
    %812 = vmatpush1.msra.mxu0 0.0
    %813 = vmatprep.subr.mxu0 0.0
    %814 = vmatpush1.msra.mxu0 0.0
    %815 = vmatprep.subr.mxu0 0.0
    %816 = vmatpush1.msra.mxu0 0.0
    %817 = vmatprep.subr.mxu0 0.0
    %818 = vmatpush1.msra.mxu0 0.0
    %819 = vmatprep.subr.mxu0 0.0
    %820 = vmatpush1.msra.mxu0 0.0
    %821 = vmatprep.subr.mxu0 0.0
    %822 = vmatpush1.msra.mxu0 0.0
    %823 = vmatprep.subr.mxu0 0.0
    %824 = vmatpush1.msra.mxu0 0.0
    %825 = vmatprep.subr.mxu0 0.0
    %826 = vmatpush1.msra.mxu0 0.0
    %827 = vmatprep.subr.mxu0 0.0
    %828 = vmatpush1.msra.mxu0 0.0
    %829 = vmatprep.subr.mxu0 0.0
    %830 = vmatpush1.msra.mxu0 0.0
    %831 = vmatprep.subr.mxu0 0.0
    %832 = vmatpush1.msra.mxu0 0.0
    %833 = vmatprep.subr.mxu0 0.0
    %834 = vmatpush1.msra.mxu0 0.0
    %835 = vmatprep.subr.mxu0 0.0
    %836 = vmatpush1.msra.mxu0 0.0
    %837 = vmatprep.subr.mxu0 0.0
    %838 = vmatpush1.msra.mxu0 0.0
    %839 = vmatprep.subr.mxu0 0.0
    %840 = vmatpush1.msra.mxu0 0.0
    %841 = vmatprep.subr.mxu0 0.0
    %842 = vmatpush1.msra.mxu0 0.0
    %843 = vmatprep.subr.mxu0 0.0
    %844 = vmatpush1.msra.mxu0 0.0
    %845 = vmatprep.subr.mxu0 0.0
    %846 = vmatpush1.msra.mxu0 0.0
    %847 = vmatprep.subr.mxu0 0.0
    %848 = vmatpush1.msra.mxu0 0.0
    %849 = vmatprep.subr.mxu0 0.0
    %850 = vmatpush1.msra.mxu0 0.0
    %851 = vmatprep.subr.mxu0 0.0
    %852 = vmatpush1.msra.mxu0 0.0
    %853 = vmatprep.subr.mxu0 0.0
    %854 = vmatpush1.msra.mxu0 0.0
    %855 = vmatprep.subr.mxu0 0.0
    %856 = vmatpush1.msra.mxu0 0.0
    %857 = vmatprep.mubr.f32.mxu0 0.0
    %858 = vmatmul.mubr.f32.gmra.mrb[0].mxu0 %v787
    %v859 = vpop.f32.mrb[0].mxu0
    %v860 = vadd.f32 %v774, %v859
    %v861 = vpop.f32.mrb[0].mxu0
    %862 = vmatprep.mubr.f32.mxu0 0.0
    %863 = vmatmul.mubr.f32.gmra.mrb[0].mxu0 %v789
    %v864 = vpop.f32.mrb[0].mxu0
    %v865 = vadd.f32 %v779, %v864
    %v866 = vpop.f32.mrb[0].mxu0
    %867 = vmatprep.mubr.f32.mxu0 0.0
    %868 = vmatmul.mubr.f32.gmra.mrb[0].mxu0 %v791
    %v869 = vpop.f32.mrb[0].mxu0
    %v870 = vadd.f32 %v784, %v869
    %v871 = vpop.f32.mrb[0].mxu0
    %872 = vdwg.mxu0
    %v873 = vld [vmem:[#allocation10] sm:$0xff]
    %v874 = vld [vmem:[#allocation10 + $0x8] sm:$0xff]
    %v875 = vld [vmem:[#allocation10 + $0x10] sm:$0xff]
    %v876 = vld [vmem:[#allocation10 + $0x18] sm:$0xff]
    %v878 = vsel %vm275, %v584, 0
    %v881 = vsel %vm275, %v589, 0
    %v884 = vsel %vm275, %v594, 0
    %886 = vmatprep.subr.mxu0 0.0
    %887 = vmatpush1.msra.mxu0 %v873
    %888 = vmatprep.subr.mxu0 0.0
    %889 = vmatpush1.msra.mxu0 %v874
    %890 = vmatprep.subr.mxu0 0.0
    %891 = vmatpush1.msra.mxu0 %v875
    %892 = vmatprep.subr.mxu0 0.0
    %893 = vmatpush1.msra.mxu0 %v876
    %894 = vmatprep.subr.mxu0 0.0
    %895 = vmatpush1.msra.mxu0 0.0
    %896 = vmatprep.subr.mxu0 0.0
    %897 = vmatpush1.msra.mxu0 0.0
    %898 = vmatprep.subr.mxu0 0.0
    %899 = vmatpush1.msra.mxu0 0.0
    %900 = vmatprep.subr.mxu0 0.0
    %901 = vmatpush1.msra.mxu0 0.0
    %902 = vmatprep.subr.mxu0 0.0
    %903 = vmatpush1.msra.mxu0 0.0
    %904 = vmatprep.subr.mxu0 0.0
    %905 = vmatpush1.msra.mxu0 0.0
    %906 = vmatprep.subr.mxu0 0.0
    %907 = vmatpush1.msra.mxu0 0.0
    %908 = vmatprep.subr.mxu0 0.0
    %909 = vmatpush1.msra.mxu0 0.0
    %910 = vmatprep.subr.mxu0 0.0
    %911 = vmatpush1.msra.mxu0 0.0
    %912 = vmatprep.subr.mxu0 0.0
    %913 = vmatpush1.msra.mxu0 0.0
    %914 = vmatprep.subr.mxu0 0.0
    %915 = vmatpush1.msra.mxu0 0.0
    %916 = vmatprep.subr.mxu0 0.0
    %917 = vmatpush1.msra.mxu0 0.0
    %918 = vmatprep.subr.mxu0 0.0
    %919 = vmatpush1.msra.mxu0 0.0
    %920 = vmatprep.subr.mxu0 0.0
    %921 = vmatpush1.msra.mxu0 0.0
    %922 = vmatprep.subr.mxu0 0.0
    %923 = vmatpush1.msra.mxu0 0.0
    %924 = vmatprep.subr.mxu0 0.0
    %925 = vmatpush1.msra.mxu0 0.0
    %926 = vmatprep.subr.mxu0 0.0
    %927 = vmatpush1.msra.mxu0 0.0
    %928 = vmatprep.subr.mxu0 0.0
    %929 = vmatpush1.msra.mxu0 0.0
    %930 = vmatprep.subr.mxu0 0.0
    %931 = vmatpush1.msra.mxu0 0.0
    %932 = vmatprep.subr.mxu0 0.0
    %933 = vmatpush1.msra.mxu0 0.0
    %934 = vmatprep.subr.mxu0 0.0
    %935 = vmatpush1.msra.mxu0 0.0
    %936 = vmatprep.subr.mxu0 0.0
    %937 = vmatpush1.msra.mxu0 0.0
    %938 = vmatprep.subr.mxu0 0.0
    %939 = vmatpush1.msra.mxu0 0.0
    %940 = vmatprep.subr.mxu0 0.0
    %941 = vmatpush1.msra.mxu0 0.0
    %942 = vmatprep.subr.mxu0 0.0
    %943 = vmatpush1.msra.mxu0 0.0
    %944 = vmatprep.subr.mxu0 0.0
    %945 = vmatpush1.msra.mxu0 0.0
    %946 = vmatprep.subr.mxu0 0.0
    %947 = vmatpush1.msra.mxu0 0.0
    %948 = vmatprep.subr.mxu0 0.0
    %949 = vmatpush1.msra.mxu0 0.0
    %950 = vmatprep.mubr.f32.mxu0 0.0
    %951 = vmatmul.mubr.f32.gmra.mrb[0].mxu0 %v878
    %v952 = vpop.f32.mrb[0].mxu0
    %v953 = vadd.f32 0.0, %v952
    %v954 = vpop.f32.mrb[0].mxu0
    %955 = vmatprep.mubr.f32.mxu0 0.0
    %956 = vmatmul.mubr.f32.gmra.mrb[0].mxu0 %v881
    %v957 = vpop.f32.mrb[0].mxu0
    %v958 = vadd.f32 0.0, %v957
    %v959 = vpop.f32.mrb[0].mxu0
    %960 = vmatprep.mubr.f32.mxu0 0.0
    %961 = vmatmul.mubr.f32.gmra.mrb[0].mxu0 %v884
    %v962 = vpop.f32.mrb[0].mxu0
    %v963 = vadd.f32 0.0, %v962
    %v964 = vpop.f32.mrb[0].mxu0
    %965 = vdwg.mxu0
    %v966 = vadd.f32 %v860, %v953
    %v967 = vadd.f32 %v865, %v958
    %v968 = vadd.f32 %v870, %v963
    %v969 = vld [vmem:[#allocation11] sm:$0xff]
    %v970 = vld [vmem:[#allocation11 + $0x8] sm:$0xff]
    %v971 = vld [vmem:[#allocation11 + $0x10] sm:$0xff]
    %v972 = vld [vmem:[#allocation11 + $0x18] sm:$0xff]
    %v974 = vsel %vm275, %v673, 0
    %v977 = vsel %vm275, %v678, 0
    %v980 = vsel %vm275, %v683, 0
    %982 = vmatprep.subr.mxu0 0.0
    %983 = vmatpush1.msra.mxu0 %v969
    %984 = vmatprep.subr.mxu0 0.0
    %985 = vmatpush1.msra.mxu0 %v970
    %986 = vmatprep.subr.mxu0 0.0
    %987 = vmatpush1.msra.mxu0 %v971
    %988 = vmatprep.subr.mxu0 0.0
    %989 = vmatpush1.msra.mxu0 %v972
    %990 = vmatprep.subr.mxu0 0.0
    %991 = vmatpush1.msra.mxu0 0.0
    %992 = vmatprep.subr.mxu0 0.0
    %993 = vmatpush1.msra.mxu0 0.0
    %994 = vmatprep.subr.mxu0 0.0
    %995 = vmatpush1.msra.mxu0 0.0
    %996 = vmatprep.subr.mxu0 0.0
    %997 = vmatpush1.msra.mxu0 0.0
    %998 = vmatprep.subr.mxu0 0.0
    %999 = vmatpush1.msra.mxu0 0.0
    %1000 = vmatprep.subr.mxu0 0.0
    %1001 = vmatpush1.msra.mxu0 0.0
    %1002 = vmatprep.subr.mxu0 0.0
    %1003 = vmatpush1.msra.mxu0 0.0
    %1004 = vmatprep.subr.mxu0 0.0
    %1005 = vmatpush1.msra.mxu0 0.0
    %1006 = vmatprep.subr.mxu0 0.0
    %1007 = vmatpush1.msra.mxu0 0.0
    %1008 = vmatprep.subr.mxu0 0.0
    %1009 = vmatpush1.msra.mxu0 0.0
    %1010 = vmatprep.subr.mxu0 0.0
    %1011 = vmatpush1.msra.mxu0 0.0
    %1012 = vmatprep.subr.mxu0 0.0
    %1013 = vmatpush1.msra.mxu0 0.0
    %1014 = vmatprep.subr.mxu0 0.0
    %1015 = vmatpush1.msra.mxu0 0.0
    %1016 = vmatprep.subr.mxu0 0.0
    %1017 = vmatpush1.msra.mxu0 0.0
    %1018 = vmatprep.subr.mxu0 0.0
    %1019 = vmatpush1.msra.mxu0 0.0
    %1020 = vmatprep.subr.mxu0 0.0
    %1021 = vmatpush1.msra.mxu0 0.0
    %1022 = vmatprep.subr.mxu0 0.0
    %1023 = vmatpush1.msra.mxu0 0.0
    %1024 = vmatprep.subr.mxu0 0.0
    %1025 = vmatpush1.msra.mxu0 0.0
    %1026 = vmatprep.subr.mxu0 0.0
    %1027 = vmatpush1.msra.mxu0 0.0
    %1028 = vmatprep.subr.mxu0 0.0
    %1029 = vmatpush1.msra.mxu0 0.0
    %1030 = vmatprep.subr.mxu0 0.0
    %1031 = vmatpush1.msra.mxu0 0.0
    %1032 = vmatprep.subr.mxu0 0.0
    %1033 = vmatpush1.msra.mxu0 0.0
    %1034 = vmatprep.subr.mxu0 0.0
    %1035 = vmatpush1.msra.mxu0 0.0
    %1036 = vmatprep.subr.mxu0 0.0
    %1037 = vmatpush1.msra.mxu0 0.0
    %1038 = vmatprep.subr.mxu0 0.0
    %1039 = vmatpush1.msra.mxu0 0.0
    %1040 = vmatprep.subr.mxu0 0.0
    %1041 = vmatpush1.msra.mxu0 0.0
    %1042 = vmatprep.subr.mxu0 0.0
    %1043 = vmatpush1.msra.mxu0 0.0
    %1044 = vmatprep.subr.mxu0 0.0
    %1045 = vmatpush1.msra.mxu0 0.0
    %1046 = vmatprep.mubr.f32.mxu0 0.0
    %1047 = vmatmul.mubr.f32.gmra.mrb[0].mxu0 %v974
    %v1048 = vpop.f32.mrb[0].mxu0
    %v1049 = vadd.f32 0.0, %v1048
    %v1050 = vpop.f32.mrb[0].mxu0
    %1051 = vmatprep.mubr.f32.mxu0 0.0
    %1052 = vmatmul.mubr.f32.gmra.mrb[0].mxu0 %v977
    %v1053 = vpop.f32.mrb[0].mxu0
    %v1054 = vadd.f32 0.0, %v1053
    %v1055 = vpop.f32.mrb[0].mxu0
    %1056 = vmatprep.mubr.f32.mxu0 0.0
    %1057 = vmatmul.mubr.f32.gmra.mrb[0].mxu0 %v980
    %v1058 = vpop.f32.mrb[0].mxu0
    %v1059 = vadd.f32 0.0, %v1058
    %v1060 = vpop.f32.mrb[0].mxu0
    %1061 = vdwg.mxu0
    %v1062 = vadd.f32 %v966, %v1049
    %v1063 = vadd.f32 %v967, %v1054
    %v1064 = vadd.f32 %v968, %v1059
    %v1065 = vld [vmem:[#allocation13] sm:$0x1]
    %v1067 = vlaneseq
    %v1068 = vshrl.u32 %v1067, 7
    %v1069 = vsub.s32 0, %v1068
    %v1070 = vrot.slane %v1065, %v1069
    %v1072 = vadd.f32 %v1062, %v1070
    %v1073 = vadd.f32 %v1063, %v1070
    %v1074 = vadd.f32 %v1064, %v1070
    %v1075 = vld [vmem:[#allocation14] sm:$0xff]
    %v1076 = vld [vmem:[#allocation14 + $0x8] sm:$0xff]
    %v1077 = vld [vmem:[#allocation14 + $0x10] sm:$0xff]
    %v1078 = vld [vmem:[#allocation14 + $0x18] sm:$0xff]
    %v1079 = vld [vmem:[#allocation14 + $0x20] sm:$0xff]
    %v1080 = vld [vmem:[#allocation14 + $0x28] sm:$0xff]
    %v1081 = vld [vmem:[#allocation14 + $0x30] sm:$0xff]
    %v1082 = vld [vmem:[#allocation14 + $0x38] sm:$0xff]
    %v1083 = vld [vmem:[#allocation16] sm:$0x1]
    %v1085 = vlaneseq
    %v1086 = vshrl.u32 %v1085, 7
    %v1087 = vsub.s32 0, %v1086
    %v1088 = vrot.slane %v1083, %v1087
    %v1091 = vsel %vm316, %v1072, 0
    %v1094 = vsel %vm316, %v1073, 0
    %v1097 = vsel %vm316, %v1074, 0
    %1099 = vmatprep.subr.mxu0 0.0
    %1100 = vmatpush1.msra.mxu0 %v1075
    %1101 = vmatprep.subr.mxu0 0.0
    %1102 = vmatpush1.msra.mxu0 %v1076
    %1103 = vmatprep.subr.mxu0 0.0
    %1104 = vmatpush1.msra.mxu0 %v1077
    %1105 = vmatprep.subr.mxu0 0.0
    %1106 = vmatpush1.msra.mxu0 %v1078
    %1107 = vmatprep.subr.mxu0 0.0
    %1108 = vmatpush1.msra.mxu0 %v1079
    %1109 = vmatprep.subr.mxu0 0.0
    %1110 = vmatpush1.msra.mxu0 %v1080
    %1111 = vmatprep.subr.mxu0 0.0
    %1112 = vmatpush1.msra.mxu0 %v1081
    %1113 = vmatprep.subr.mxu0 0.0
    %1114 = vmatpush1.msra.mxu0 %v1082
    %1115 = vmatprep.subr.mxu0 0.0
    %1116 = vmatpush1.msra.mxu0 0.0
    %1117 = vmatprep.subr.mxu0 0.0
    %1118 = vmatpush1.msra.mxu0 0.0
    %1119 = vmatprep.subr.mxu0 0.0
    %1120 = vmatpush1.msra.mxu0 0.0
    %1121 = vmatprep.subr.mxu0 0.0
    %1122 = vmatpush1.msra.mxu0 0.0
    %1123 = vmatprep.subr.mxu0 0.0
    %1124 = vmatpush1.msra.mxu0 0.0
    %1125 = vmatprep.subr.mxu0 0.0
    %1126 = vmatpush1.msra.mxu0 0.0
    %1127 = vmatprep.subr.mxu0 0.0
    %1128 = vmatpush1.msra.mxu0 0.0
    %1129 = vmatprep.subr.mxu0 0.0
    %1130 = vmatpush1.msra.mxu0 0.0
    %1131 = vmatprep.subr.mxu0 0.0
    %1132 = vmatpush1.msra.mxu0 0.0
    %1133 = vmatprep.subr.mxu0 0.0
    %1134 = vmatpush1.msra.mxu0 0.0
    %1135 = vmatprep.subr.mxu0 0.0
    %1136 = vmatpush1.msra.mxu0 0.0
    %1137 = vmatprep.subr.mxu0 0.0
    %1138 = vmatpush1.msra.mxu0 0.0
    %1139 = vmatprep.subr.mxu0 0.0
    %1140 = vmatpush1.msra.mxu0 0.0
    %1141 = vmatprep.subr.mxu0 0.0
    %1142 = vmatpush1.msra.mxu0 0.0
    %1143 = vmatprep.subr.mxu0 0.0
    %1144 = vmatpush1.msra.mxu0 0.0
    %1145 = vmatprep.subr.mxu0 0.0
    %1146 = vmatpush1.msra.mxu0 0.0
    %1147 = vmatprep.subr.mxu0 0.0
    %1148 = vmatpush1.msra.mxu0 0.0
    %1149 = vmatprep.subr.mxu0 0.0
    %1150 = vmatpush1.msra.mxu0 0.0
    %1151 = vmatprep.subr.mxu0 0.0
    %1152 = vmatpush1.msra.mxu0 0.0
    %1153 = vmatprep.subr.mxu0 0.0
    %1154 = vmatpush1.msra.mxu0 0.0
    %1155 = vmatprep.subr.mxu0 0.0
    %1156 = vmatpush1.msra.mxu0 0.0
    %1157 = vmatprep.subr.mxu0 0.0
    %1158 = vmatpush1.msra.mxu0 0.0
    %1159 = vmatprep.subr.mxu0 0.0
    %1160 = vmatpush1.msra.mxu0 0.0
    %1161 = vmatprep.subr.mxu0 0.0
    %1162 = vmatpush1.msra.mxu0 0.0
    %1163 = vmatprep.mubr.f32.mxu0 0.0
    %1164 = vmatmul.mubr.f32.gmra.mrb[0].mxu0 %v1091
    %v1165 = vpop.f32.mrb[0].mxu0
    %v1166 = vadd.f32 %v1088, %v1165
    %v1167 = vpop.f32.mrb[0].mxu0
    %1168 = vmatprep.mubr.f32.mxu0 0.0
    %1169 = vmatmul.mubr.f32.gmra.mrb[0].mxu0 %v1094
    %v1170 = vpop.f32.mrb[0].mxu0
    %v1171 = vadd.f32 %v1088, %v1170
    %v1172 = vpop.f32.mrb[0].mxu0
    %1173 = vmatprep.mubr.f32.mxu0 0.0
    %1174 = vmatmul.mubr.f32.gmra.mrb[0].mxu0 %v1097
    %v1175 = vpop.f32.mrb[0].mxu0
    %v1176 = vadd.f32 %v1088, %v1175
    %v1177 = vpop.f32.mrb[0].mxu0
    %1178 = vdwg.mxu0
    %v1179 = vmax.f32 %v1166, 0.0
    %v1180 = vmax.f32 %v1171, 0.0
    %v1181 = vmax.f32 %v1176, 0.0
    %1182 = vmatprep.subr.mxu0 0.0
    %1183 = vmatpush1.msra.mxu0 %v1179
    %1184 = vmatprep.subr.mxu0 0.0
    %1185 = vmatpush1.msra.mxu0 %v1180
    %1186 = vmatprep.subr.mxu0 0.0
    %1187 = vmatpush1.msra.mxu0 %v1181
    %1188 = vmatprep.subr.mxu0 0.0
    %1189 = vmatpush1.msra.mxu0 0.0
    %1190 = vmatprep.subr.mxu0 0.0
    %1191 = vmatpush1.msra.mxu0 0.0
    %1192 = vmatprep.subr.mxu0 0.0
    %1193 = vmatpush1.msra.mxu0 0.0
    %1194 = vmatprep.subr.mxu0 0.0
    %1195 = vmatpush1.msra.mxu0 0.0
    %1196 = vmatprep.subr.mxu0 0.0
    %1197 = vmatpush1.msra.mxu0 0.0
    %1198 = vmatprep.subr.mxu0 0.0
    %1199 = vmatpush1.msra.mxu0 0.0
    %1200 = vmatprep.subr.mxu0 0.0
    %1201 = vmatpush1.msra.mxu0 0.0
    %1202 = vmatprep.subr.mxu0 0.0
    %1203 = vmatpush1.msra.mxu0 0.0
    %1204 = vmatprep.subr.mxu0 0.0
    %1205 = vmatpush1.msra.mxu0 0.0
    %1206 = vmatprep.subr.mxu0 0.0
    %1207 = vmatpush1.msra.mxu0 0.0
    %1208 = vmatprep.subr.mxu0 0.0
    %1209 = vmatpush1.msra.mxu0 0.0
    %1210 = vmatprep.subr.mxu0 0.0
    %1211 = vmatpush1.msra.mxu0 0.0
    %1212 = vmatprep.subr.mxu0 0.0
    %1213 = vmatpush1.msra.mxu0 0.0
    %1214 = vmatprep.subr.mxu0 0.0
    %1215 = vmatpush1.msra.mxu0 0.0
    %1216 = vmatprep.subr.mxu0 0.0
    %1217 = vmatpush1.msra.mxu0 0.0
    %1218 = vmatprep.subr.mxu0 0.0
    %1219 = vmatpush1.msra.mxu0 0.0
    %1220 = vmatprep.subr.mxu0 0.0
    %1221 = vmatpush1.msra.mxu0 0.0
    %1222 = vmatprep.subr.mxu0 0.0
    %1223 = vmatpush1.msra.mxu0 0.0
    %1224 = vmatprep.subr.mxu0 0.0
    %1225 = vmatpush1.msra.mxu0 0.0
    %1226 = vmatprep.subr.mxu0 0.0
    %1227 = vmatpush1.msra.mxu0 0.0
    %1228 = vmatprep.subr.mxu0 0.0
    %1229 = vmatpush1.msra.mxu0 0.0
    %1230 = vmatprep.subr.mxu0 0.0
    %1231 = vmatpush1.msra.mxu0 0.0
    %1232 = vmatprep.subr.mxu0 0.0
    %1233 = vmatpush1.msra.mxu0 0.0
    %1234 = vmatprep.subr.mxu0 0.0
    %1235 = vmatpush1.msra.mxu0 0.0
    %1236 = vmatprep.subr.mxu0 0.0
    %1237 = vmatpush1.msra.mxu0 0.0
    %1238 = vmatprep.subr.mxu0 0.0
    %1239 = vmatpush1.msra.mxu0 0.0
    %1240 = vmatprep.subr.mxu0 0.0
    %1241 = vmatpush1.msra.mxu0 0.0
    %1242 = vmatprep.subr.mxu0 0.0
    %1243 = vmatpush1.msra.mxu0 0.0
    %1244 = vmatprep.subr.mxu0 0.0
    %1245 = vmatpush1.msra.mxu0 0.0
    %1246 = vmatprep.mubr.f32.mxu0 0.0
    %1247 = vmatmul.mubr.f32.gmra.mrb[0].mxu0 %v408
    %v1248 = vpop.f32.mrb[0].mxu0
    %v1249 = vadd.f32 0.0, %v1248
    %v1250 = vpop.f32.mrb[0].mxu0
    %1251 = vmatprep.mubr.f32.mxu0 0.0
    %1252 = vmatmul.mubr.f32.gmra.mrb[0].mxu0 %v411
    %v1253 = vpop.f32.mrb[0].mxu0
    %v1254 = vadd.f32 0.0, %v1253
    %v1255 = vpop.f32.mrb[0].mxu0
    %1256 = vmatprep.mubr.f32.mxu0 0.0
    %1257 = vmatmul.mubr.f32.gmra.mrb[0].mxu0 %v414
    %v1258 = vpop.f32.mrb[0].mxu0
    %v1259 = vadd.f32 0.0, %v1258
    %v1260 = vpop.f32.mrb[0].mxu0
    %1261 = vdwg.mxu0
    %1265 = vrot.lane.b32.xlu0 %v1179, 96
    %v1266 = vpop.permute.xlu0 %1265
    %1267 = vrot.lane.b32.xlu0 %v1180, 96
    %v1268 = vpop.permute.xlu0 %1267
    %1269 = vrot.lane.b32.xlu0 %v1181, 96
    %v1270 = vpop.permute.xlu0 %1269
    %1274 = vmatprep.subr.mxu0 0.0
    %1275 = vmatpush1.msra.mxu0 %v1266
    %1276 = vmatprep.subr.mxu0 0.0
    %1277 = vmatpush1.msra.mxu0 %v1268
    %1278 = vmatprep.subr.mxu0 0.0
    %1279 = vmatpush1.msra.mxu0 %v1270
    %1280 = vmatprep.subr.mxu0 0.0
    %1281 = vmatpush1.msra.mxu0 0.0
    %1282 = vmatprep.subr.mxu0 0.0
    %1283 = vmatpush1.msra.mxu0 0.0
    %1284 = vmatprep.subr.mxu0 0.0
    %1285 = vmatpush1.msra.mxu0 0.0
    %1286 = vmatprep.subr.mxu0 0.0
    %1287 = vmatpush1.msra.mxu0 0.0
    %1288 = vmatprep.subr.mxu0 0.0
    %1289 = vmatpush1.msra.mxu0 0.0
    %1290 = vmatprep.subr.mxu0 0.0
    %1291 = vmatpush1.msra.mxu0 0.0
    %1292 = vmatprep.subr.mxu0 0.0
    %1293 = vmatpush1.msra.mxu0 0.0
    %1294 = vmatprep.subr.mxu0 0.0
    %1295 = vmatpush1.msra.mxu0 0.0
    %1296 = vmatprep.subr.mxu0 0.0
    %1297 = vmatpush1.msra.mxu0 0.0
    %1298 = vmatprep.subr.mxu0 0.0
    %1299 = vmatpush1.msra.mxu0 0.0
    %1300 = vmatprep.subr.mxu0 0.0
    %1301 = vmatpush1.msra.mxu0 0.0
    %1302 = vmatprep.subr.mxu0 0.0
    %1303 = vmatpush1.msra.mxu0 0.0
    %1304 = vmatprep.subr.mxu0 0.0
    %1305 = vmatpush1.msra.mxu0 0.0
    %1306 = vmatprep.subr.mxu0 0.0
    %1307 = vmatpush1.msra.mxu0 0.0
    %1308 = vmatprep.subr.mxu0 0.0
    %1309 = vmatpush1.msra.mxu0 0.0
    %1310 = vmatprep.subr.mxu0 0.0
    %1311 = vmatpush1.msra.mxu0 0.0
    %1312 = vmatprep.subr.mxu0 0.0
    %1313 = vmatpush1.msra.mxu0 0.0
    %1314 = vmatprep.subr.mxu0 0.0
    %1315 = vmatpush1.msra.mxu0 0.0
    %1316 = vmatprep.subr.mxu0 0.0
    %1317 = vmatpush1.msra.mxu0 0.0
    %1318 = vmatprep.subr.mxu0 0.0
    %1319 = vmatpush1.msra.mxu0 0.0
    %1320 = vmatprep.subr.mxu0 0.0
    %1321 = vmatpush1.msra.mxu0 0.0
    %1322 = vmatprep.subr.mxu0 0.0
    %1323 = vmatpush1.msra.mxu0 0.0
    %1324 = vmatprep.subr.mxu0 0.0
    %1325 = vmatpush1.msra.mxu0 0.0
    %1326 = vmatprep.subr.mxu0 0.0
    %1327 = vmatpush1.msra.mxu0 0.0
    %1328 = vmatprep.subr.mxu0 0.0
    %1329 = vmatpush1.msra.mxu0 0.0
    %1330 = vmatprep.subr.mxu0 0.0
    %1331 = vmatpush1.msra.mxu0 0.0
    %1332 = vmatprep.subr.mxu0 0.0
    %1333 = vmatpush1.msra.mxu0 0.0
    %1334 = vmatprep.subr.mxu0 0.0
    %1335 = vmatpush1.msra.mxu0 0.0
    %1336 = vmatprep.subr.mxu0 0.0
    %1337 = vmatpush1.msra.mxu0 0.0
    %1338 = vmatprep.mubr.f32.mxu0 0.0
    %1339 = vmatmul.mubr.f32.gmra.mrb[0].mxu0 %v509
    %v1340 = vpop.f32.mrb[0].mxu0
    %v1341 = vadd.f32 0.0, %v1340
    %v1342 = vpop.f32.mrb[0].mxu0
    %1343 = vmatprep.mubr.f32.mxu0 0.0
    %1344 = vmatmul.mubr.f32.gmra.mrb[0].mxu0 %v512
    %v1345 = vpop.f32.mrb[0].mxu0
    %v1346 = vadd.f32 0.0, %v1345
    %v1347 = vpop.f32.mrb[0].mxu0
    %1348 = vmatprep.mubr.f32.mxu0 0.0
    %1349 = vmatmul.mubr.f32.gmra.mrb[0].mxu0 %v515
    %v1350 = vpop.f32.mrb[0].mxu0
    %v1351 = vadd.f32 0.0, %v1350
    %v1352 = vpop.f32.mrb[0].mxu0
    %1353 = vdwg.mxu0
    %1354 = vmatprep.subr.mxu0 0.0
    %1355 = vmatpush1.msra.mxu0 %v1179
    %1356 = vmatprep.subr.mxu0 0.0
    %1357 = vmatpush1.msra.mxu0 %v1180
    %1358 = vmatprep.subr.mxu0 0.0
    %1359 = vmatpush1.msra.mxu0 %v1181
    %1360 = vmatprep.subr.mxu0 0.0
    %1361 = vmatpush1.msra.mxu0 0.0
    %1362 = vmatprep.subr.mxu0 0.0
    %1363 = vmatpush1.msra.mxu0 0.0
    %1364 = vmatprep.subr.mxu0 0.0
    %1365 = vmatpush1.msra.mxu0 0.0
    %1366 = vmatprep.subr.mxu0 0.0
    %1367 = vmatpush1.msra.mxu0 0.0
    %1368 = vmatprep.subr.mxu0 0.0
    %1369 = vmatpush1.msra.mxu0 0.0
    %1370 = vmatprep.subr.mxu0 0.0
    %1371 = vmatpush1.msra.mxu0 0.0
    %1372 = vmatprep.subr.mxu0 0.0
    %1373 = vmatpush1.msra.mxu0 0.0
    %1374 = vmatprep.subr.mxu0 0.0
    %1375 = vmatpush1.msra.mxu0 0.0
    %1376 = vmatprep.subr.mxu0 0.0
    %1377 = vmatpush1.msra.mxu0 0.0
    %1378 = vmatprep.subr.mxu0 0.0
    %1379 = vmatpush1.msra.mxu0 0.0
    %1380 = vmatprep.subr.mxu0 0.0
    %1381 = vmatpush1.msra.mxu0 0.0
    %1382 = vmatprep.subr.mxu0 0.0
    %1383 = vmatpush1.msra.mxu0 0.0
    %1384 = vmatprep.subr.mxu0 0.0
    %1385 = vmatpush1.msra.mxu0 0.0
    %1386 = vmatprep.subr.mxu0 0.0
    %1387 = vmatpush1.msra.mxu0 0.0
    %1388 = vmatprep.subr.mxu0 0.0
    %1389 = vmatpush1.msra.mxu0 0.0
    %1390 = vmatprep.subr.mxu0 0.0
    %1391 = vmatpush1.msra.mxu0 0.0
    %1392 = vmatprep.subr.mxu0 0.0
    %1393 = vmatpush1.msra.mxu0 0.0
    %1394 = vmatprep.subr.mxu0 0.0
    %1395 = vmatpush1.msra.mxu0 0.0
    %1396 = vmatprep.subr.mxu0 0.0
    %1397 = vmatpush1.msra.mxu0 0.0
    %1398 = vmatprep.subr.mxu0 0.0
    %1399 = vmatpush1.msra.mxu0 0.0
    %1400 = vmatprep.subr.mxu0 0.0
    %1401 = vmatpush1.msra.mxu0 0.0
    %1402 = vmatprep.subr.mxu0 0.0
    %1403 = vmatpush1.msra.mxu0 0.0
    %1404 = vmatprep.subr.mxu0 0.0
    %1405 = vmatpush1.msra.mxu0 0.0
    %1406 = vmatprep.subr.mxu0 0.0
    %1407 = vmatpush1.msra.mxu0 0.0
    %1408 = vmatprep.subr.mxu0 0.0
    %1409 = vmatpush1.msra.mxu0 0.0
    %1410 = vmatprep.subr.mxu0 0.0
    %1411 = vmatpush1.msra.mxu0 0.0
    %1412 = vmatprep.subr.mxu0 0.0
    %1413 = vmatpush1.msra.mxu0 0.0
    %1414 = vmatprep.subr.mxu0 0.0
    %1415 = vmatpush1.msra.mxu0 0.0
    %1416 = vmatprep.subr.mxu0 0.0
    %1417 = vmatpush1.msra.mxu0 0.0
    %1418 = vmatprep.mubr.f32.mxu0 0.0
    %1419 = vmatmul.mubr.f32.gmra.mrb[0].mxu0 %v598
    %v1420 = vpop.f32.mrb[0].mxu0
    %v1421 = vadd.f32 0.0, %v1420
    %v1422 = vpop.f32.mrb[0].mxu0
    %1423 = vmatprep.mubr.f32.mxu0 0.0
    %1424 = vmatmul.mubr.f32.gmra.mrb[0].mxu0 %v601
    %v1425 = vpop.f32.mrb[0].mxu0
    %v1426 = vadd.f32 0.0, %v1425
    %v1427 = vpop.f32.mrb[0].mxu0
    %1428 = vmatprep.mubr.f32.mxu0 0.0
    %1429 = vmatmul.mubr.f32.gmra.mrb[0].mxu0 %v604
    %v1430 = vpop.f32.mrb[0].mxu0
    %v1431 = vadd.f32 0.0, %v1430
    %v1432 = vpop.f32.mrb[0].mxu0
    %1433 = vdwg.mxu0
    %v1434 = vld [vmem:[%s14] sm:$0xff]
    %v1435 = vld [vmem:[%s14 + $0x8] sm:$0xff]
    %v1436 = vld [vmem:[%s14 + $0x10] sm:$0xff]
    %v1437 = vld [vmem:[%s14 + $0x18] sm:$0xff]
    %v1438 = vld [vmem:[%s14 + $0x20] sm:$0xff]
    %v1439 = vld [vmem:[%s14 + $0x28] sm:$0xff]
    %v1440 = vld [vmem:[%s14 + $0x30] sm:$0xff]
    %v1441 = vld [vmem:[%s14 + $0x38] sm:$0xff]
    %v1442 = vld [vmem:[#allocation17] sm:$0xff]
    %v1443 = vld [vmem:[#allocation17 + $0x8] sm:$0xff]
    %v1444 = vld [vmem:[#allocation17 + $0x10] sm:$0xff]
    %v1445 = vld [vmem:[#allocation17 + $0x18] sm:$0xff]
    %v1447 = vsel %vm275, %v1249, 0
    %v1450 = vsel %vm275, %v1254, 0
    %v1453 = vsel %vm275, %v1259, 0
    %1455 = vmatprep.subr.mxu0 0.0
    %1456 = vmatpush1.msra.mxu0 %v1442
    %1457 = vmatprep.subr.mxu0 0.0
    %1458 = vmatpush1.msra.mxu0 %v1443
    %1459 = vmatprep.subr.mxu0 0.0
    %1460 = vmatpush1.msra.mxu0 %v1444
    %1461 = vmatprep.subr.mxu0 0.0
    %1462 = vmatpush1.msra.mxu0 %v1445
    %1463 = vmatprep.subr.mxu0 0.0
    %1464 = vmatpush1.msra.mxu0 0.0
    %1465 = vmatprep.subr.mxu0 0.0
    %1466 = vmatpush1.msra.mxu0 0.0
    %1467 = vmatprep.subr.mxu0 0.0
    %1468 = vmatpush1.msra.mxu0 0.0
    %1469 = vmatprep.subr.mxu0 0.0
    %1470 = vmatpush1.msra.mxu0 0.0
    %1471 = vmatprep.subr.mxu0 0.0
    %1472 = vmatpush1.msra.mxu0 0.0
    %1473 = vmatprep.subr.mxu0 0.0
    %1474 = vmatpush1.msra.mxu0 0.0
    %1475 = vmatprep.subr.mxu0 0.0
    %1476 = vmatpush1.msra.mxu0 0.0
    %1477 = vmatprep.subr.mxu0 0.0
    %1478 = vmatpush1.msra.mxu0 0.0
    %1479 = vmatprep.subr.mxu0 0.0
    %1480 = vmatpush1.msra.mxu0 0.0
    %1481 = vmatprep.subr.mxu0 0.0
    %1482 = vmatpush1.msra.mxu0 0.0
    %1483 = vmatprep.subr.mxu0 0.0
    %1484 = vmatpush1.msra.mxu0 0.0
    %1485 = vmatprep.subr.mxu0 0.0
    %1486 = vmatpush1.msra.mxu0 0.0
    %1487 = vmatprep.subr.mxu0 0.0
    %1488 = vmatpush1.msra.mxu0 0.0
    %1489 = vmatprep.subr.mxu0 0.0
    %1490 = vmatpush1.msra.mxu0 0.0
    %1491 = vmatprep.subr.mxu0 0.0
    %1492 = vmatpush1.msra.mxu0 0.0
    %1493 = vmatprep.subr.mxu0 0.0
    %1494 = vmatpush1.msra.mxu0 0.0
    %1495 = vmatprep.subr.mxu0 0.0
    %1496 = vmatpush1.msra.mxu0 0.0
    %1497 = vmatprep.subr.mxu0 0.0
    %1498 = vmatpush1.msra.mxu0 0.0
    %1499 = vmatprep.subr.mxu0 0.0
    %1500 = vmatpush1.msra.mxu0 0.0
    %1501 = vmatprep.subr.mxu0 0.0
    %1502 = vmatpush1.msra.mxu0 0.0
    %1503 = vmatprep.subr.mxu0 0.0
    %1504 = vmatpush1.msra.mxu0 0.0
    %1505 = vmatprep.subr.mxu0 0.0
    %1506 = vmatpush1.msra.mxu0 0.0
    %1507 = vmatprep.subr.mxu0 0.0
    %1508 = vmatpush1.msra.mxu0 0.0
    %1509 = vmatprep.subr.mxu0 0.0
    %1510 = vmatpush1.msra.mxu0 0.0
    %1511 = vmatprep.subr.mxu0 0.0
    %1512 = vmatpush1.msra.mxu0 0.0
    %1513 = vmatprep.subr.mxu0 0.0
    %1514 = vmatpush1.msra.mxu0 0.0
    %1515 = vmatprep.subr.mxu0 0.0
    %1516 = vmatpush1.msra.mxu0 0.0
    %1517 = vmatprep.subr.mxu0 0.0
    %1518 = vmatpush1.msra.mxu0 0.0
    %1519 = vmatprep.mubr.f32.mxu0 0.0
    %1520 = vmatmul.mubr.f32.gmra.mrb[0].mxu0 %v1447
    %v1521 = vpop.f32.mrb[0].mxu0
    %v1522 = vadd.f32 0.0, %v1521
    %v1523 = vpop.f32.mrb[0].mxu0
    %1524 = vmatprep.mubr.f32.mxu0 0.0
    %1525 = vmatmul.mubr.f32.gmra.mrb[0].mxu0 %v1450
    %v1526 = vpop.f32.mrb[0].mxu0
    %v1527 = vadd.f32 0.0, %v1526
    %v1528 = vpop.f32.mrb[0].mxu0
    %1529 = vmatprep.mubr.f32.mxu0 0.0
    %1530 = vmatmul.mubr.f32.gmra.mrb[0].mxu0 %v1453
    %v1531 = vpop.f32.mrb[0].mxu0
    %v1532 = vadd.f32 0.0, %v1531
    %v1533 = vpop.f32.mrb[0].mxu0
    %1534 = vdwg.mxu0
    %v1535 = vsel %vm316, %v1179, 0
    %v1537 = vsel %vm316, %v1180, 0
    %v1539 = vsel %vm316, %v1181, 0
    %1541 = vmatprep.subr.mxu0 0.0
    %1542 = vmatpush1.msra.mxu0 %v1434
    %1543 = vmatprep.subr.mxu0 0.0
    %1544 = vmatpush1.msra.mxu0 %v1435
    %1545 = vmatprep.subr.mxu0 0.0
    %1546 = vmatpush1.msra.mxu0 %v1436
    %1547 = vmatprep.subr.mxu0 0.0
    %1548 = vmatpush1.msra.mxu0 %v1437
    %1549 = vmatprep.subr.mxu0 0.0
    %1550 = vmatpush1.msra.mxu0 %v1438
    %1551 = vmatprep.subr.mxu0 0.0
    %1552 = vmatpush1.msra.mxu0 %v1439
    %1553 = vmatprep.subr.mxu0 0.0
    %1554 = vmatpush1.msra.mxu0 %v1440
    %1555 = vmatprep.subr.mxu0 0.0
    %1556 = vmatpush1.msra.mxu0 %v1441
    %1557 = vmatprep.subr.mxu0 0.0
    %1558 = vmatpush1.msra.mxu0 0.0
    %1559 = vmatprep.subr.mxu0 0.0
    %1560 = vmatpush1.msra.mxu0 0.0
    %1561 = vmatprep.subr.mxu0 0.0
    %1562 = vmatpush1.msra.mxu0 0.0
    %1563 = vmatprep.subr.mxu0 0.0
    %1564 = vmatpush1.msra.mxu0 0.0
    %1565 = vmatprep.subr.mxu0 0.0
    %1566 = vmatpush1.msra.mxu0 0.0
    %1567 = vmatprep.subr.mxu0 0.0
    %1568 = vmatpush1.msra.mxu0 0.0
    %1569 = vmatprep.subr.mxu0 0.0
    %1570 = vmatpush1.msra.mxu0 0.0
    %1571 = vmatprep.subr.mxu0 0.0
    %1572 = vmatpush1.msra.mxu0 0.0
    %1573 = vmatprep.subr.mxu0 0.0
    %1574 = vmatpush1.msra.mxu0 0.0
    %1575 = vmatprep.subr.mxu0 0.0
    %1576 = vmatpush1.msra.mxu0 0.0
    %1577 = vmatprep.subr.mxu0 0.0
    %1578 = vmatpush1.msra.mxu0 0.0
    %1579 = vmatprep.subr.mxu0 0.0
    %1580 = vmatpush1.msra.mxu0 0.0
    %1581 = vmatprep.subr.mxu0 0.0
    %1582 = vmatpush1.msra.mxu0 0.0
    %1583 = vmatprep.subr.mxu0 0.0
    %1584 = vmatpush1.msra.mxu0 0.0
    %1585 = vmatprep.subr.mxu0 0.0
    %1586 = vmatpush1.msra.mxu0 0.0
    %1587 = vmatprep.subr.mxu0 0.0
    %1588 = vmatpush1.msra.mxu0 0.0
    %1589 = vmatprep.subr.mxu0 0.0
    %1590 = vmatpush1.msra.mxu0 0.0
    %1591 = vmatprep.subr.mxu0 0.0
    %1592 = vmatpush1.msra.mxu0 0.0
    %1593 = vmatprep.subr.mxu0 0.0
    %1594 = vmatpush1.msra.mxu0 0.0
    %1595 = vmatprep.subr.mxu0 0.0
    %1596 = vmatpush1.msra.mxu0 0.0
    %1597 = vmatprep.subr.mxu0 0.0
    %1598 = vmatpush1.msra.mxu0 0.0
    %1599 = vmatprep.subr.mxu0 0.0
    %1600 = vmatpush1.msra.mxu0 0.0
    %1601 = vmatprep.subr.mxu0 0.0
    %1602 = vmatpush1.msra.mxu0 0.0
    %1603 = vmatprep.subr.mxu0 0.0
    %1604 = vmatpush1.msra.mxu0 0.0
    %1605 = vmatprep.mubr.f32.mxu0 0.0
    %1606 = vmatmul.mubr.f32.gmra.mrb[0].mxu0 %v1535
    %v1607 = vpop.f32.mrb[0].mxu0
    %v1608 = vadd.f32 %v1522, %v1607
    %v1609 = vpop.f32.mrb[0].mxu0
    %1610 = vmatprep.mubr.f32.mxu0 0.0
    %1611 = vmatmul.mubr.f32.gmra.mrb[0].mxu0 %v1537
    %v1612 = vpop.f32.mrb[0].mxu0
    %v1613 = vadd.f32 %v1527, %v1612
    %v1614 = vpop.f32.mrb[0].mxu0
    %1615 = vmatprep.mubr.f32.mxu0 0.0
    %1616 = vmatmul.mubr.f32.gmra.mrb[0].mxu0 %v1539
    %v1617 = vpop.f32.mrb[0].mxu0
    %v1618 = vadd.f32 %v1532, %v1617
    %v1619 = vpop.f32.mrb[0].mxu0
    %1620 = vdwg.mxu0
    %v1621 = vld [vmem:[#allocation19] sm:$0xff]
    %v1622 = vld [vmem:[#allocation19 + $0x8] sm:$0xff]
    %v1623 = vld [vmem:[#allocation19 + $0x10] sm:$0xff]
    %v1624 = vld [vmem:[#allocation19 + $0x18] sm:$0xff]
    %v1626 = vsel %vm275, %v1341, 0
    %v1629 = vsel %vm275, %v1346, 0
    %v1632 = vsel %vm275, %v1351, 0
    %1634 = vmatprep.subr.mxu0 0.0
    %1635 = vmatpush1.msra.mxu0 %v1621
    %1636 = vmatprep.subr.mxu0 0.0
    %1637 = vmatpush1.msra.mxu0 %v1622
    %1638 = vmatprep.subr.mxu0 0.0
    %1639 = vmatpush1.msra.mxu0 %v1623
    %1640 = vmatprep.subr.mxu0 0.0
    %1641 = vmatpush1.msra.mxu0 %v1624
    %1642 = vmatprep.subr.mxu0 0.0
    %1643 = vmatpush1.msra.mxu0 0.0
    %1644 = vmatprep.subr.mxu0 0.0
    %1645 = vmatpush1.msra.mxu0 0.0
    %1646 = vmatprep.subr.mxu0 0.0
    %1647 = vmatpush1.msra.mxu0 0.0
    %1648 = vmatprep.subr.mxu0 0.0
    %1649 = vmatpush1.msra.mxu0 0.0
    %1650 = vmatprep.subr.mxu0 0.0
    %1651 = vmatpush1.msra.mxu0 0.0
    %1652 = vmatprep.subr.mxu0 0.0
    %1653 = vmatpush1.msra.mxu0 0.0
    %1654 = vmatprep.subr.mxu0 0.0
    %1655 = vmatpush1.msra.mxu0 0.0
    %1656 = vmatprep.subr.mxu0 0.0
    %1657 = vmatpush1.msra.mxu0 0.0
    %1658 = vmatprep.subr.mxu0 0.0
    %1659 = vmatpush1.msra.mxu0 0.0
    %1660 = vmatprep.subr.mxu0 0.0
    %1661 = vmatpush1.msra.mxu0 0.0
    %1662 = vmatprep.subr.mxu0 0.0
    %1663 = vmatpush1.msra.mxu0 0.0
    %1664 = vmatprep.subr.mxu0 0.0
    %1665 = vmatpush1.msra.mxu0 0.0
    %1666 = vmatprep.subr.mxu0 0.0
    %1667 = vmatpush1.msra.mxu0 0.0
    %1668 = vmatprep.subr.mxu0 0.0
    %1669 = vmatpush1.msra.mxu0 0.0
    %1670 = vmatprep.subr.mxu0 0.0
    %1671 = vmatpush1.msra.mxu0 0.0
    %1672 = vmatprep.subr.mxu0 0.0
    %1673 = vmatpush1.msra.mxu0 0.0
    %1674 = vmatprep.subr.mxu0 0.0
    %1675 = vmatpush1.msra.mxu0 0.0
    %1676 = vmatprep.subr.mxu0 0.0
    %1677 = vmatpush1.msra.mxu0 0.0
    %1678 = vmatprep.subr.mxu0 0.0
    %1679 = vmatpush1.msra.mxu0 0.0
    %1680 = vmatprep.subr.mxu0 0.0
    %1681 = vmatpush1.msra.mxu0 0.0
    %1682 = vmatprep.subr.mxu0 0.0
    %1683 = vmatpush1.msra.mxu0 0.0
    %1684 = vmatprep.subr.mxu0 0.0
    %1685 = vmatpush1.msra.mxu0 0.0
    %1686 = vmatprep.subr.mxu0 0.0
    %1687 = vmatpush1.msra.mxu0 0.0
    %1688 = vmatprep.subr.mxu0 0.0
    %1689 = vmatpush1.msra.mxu0 0.0
    %1690 = vmatprep.subr.mxu0 0.0
    %1691 = vmatpush1.msra.mxu0 0.0
    %1692 = vmatprep.subr.mxu0 0.0
    %1693 = vmatpush1.msra.mxu0 0.0
    %1694 = vmatprep.subr.mxu0 0.0
    %1695 = vmatpush1.msra.mxu0 0.0
    %1696 = vmatprep.subr.mxu0 0.0
    %1697 = vmatpush1.msra.mxu0 0.0
    %1698 = vmatprep.mubr.f32.mxu0 0.0
    %1699 = vmatmul.mubr.f32.gmra.mrb[0].mxu0 %v1626
    %v1700 = vpop.f32.mrb[0].mxu0
    %v1701 = vadd.f32 0.0, %v1700
    %v1702 = vpop.f32.mrb[0].mxu0
    %1703 = vmatprep.mubr.f32.mxu0 0.0
    %1704 = vmatmul.mubr.f32.gmra.mrb[0].mxu0 %v1629
    %v1705 = vpop.f32.mrb[0].mxu0
    %v1706 = vadd.f32 0.0, %v1705
    %v1707 = vpop.f32.mrb[0].mxu0
    %1708 = vmatprep.mubr.f32.mxu0 0.0
    %1709 = vmatmul.mubr.f32.gmra.mrb[0].mxu0 %v1632
    %v1710 = vpop.f32.mrb[0].mxu0
    %v1711 = vadd.f32 0.0, %v1710
    %v1712 = vpop.f32.mrb[0].mxu0
    %1713 = vdwg.mxu0
    %v1714 = vadd.f32 %v1608, %v1701
    %v1715 = vadd.f32 %v1613, %v1706
    %v1716 = vadd.f32 %v1618, %v1711
    %v1717 = vld [vmem:[#allocation20] sm:$0xff]
    %v1718 = vld [vmem:[#allocation20 + $0x8] sm:$0xff]
    %v1719 = vld [vmem:[#allocation20 + $0x10] sm:$0xff]
    %v1720 = vld [vmem:[#allocation20 + $0x18] sm:$0xff]
    %v1722 = vsel %vm275, %v1421, 0
    %v1725 = vsel %vm275, %v1426, 0
    %v1728 = vsel %vm275, %v1431, 0
    %1730 = vmatprep.subr.mxu0 0.0
    %1731 = vmatpush1.msra.mxu0 %v1717
    %1732 = vmatprep.subr.mxu0 0.0
    %1733 = vmatpush1.msra.mxu0 %v1718
    %1734 = vmatprep.subr.mxu0 0.0
    %1735 = vmatpush1.msra.mxu0 %v1719
    %1736 = vmatprep.subr.mxu0 0.0
    %1737 = vmatpush1.msra.mxu0 %v1720
    %1738 = vmatprep.subr.mxu0 0.0
    %1739 = vmatpush1.msra.mxu0 0.0
    %1740 = vmatprep.subr.mxu0 0.0
    %1741 = vmatpush1.msra.mxu0 0.0
    %1742 = vmatprep.subr.mxu0 0.0
    %1743 = vmatpush1.msra.mxu0 0.0
    %1744 = vmatprep.subr.mxu0 0.0
    %1745 = vmatpush1.msra.mxu0 0.0
    %1746 = vmatprep.subr.mxu0 0.0
    %1747 = vmatpush1.msra.mxu0 0.0
    %1748 = vmatprep.subr.mxu0 0.0
    %1749 = vmatpush1.msra.mxu0 0.0
    %1750 = vmatprep.subr.mxu0 0.0
    %1751 = vmatpush1.msra.mxu0 0.0
    %1752 = vmatprep.subr.mxu0 0.0
    %1753 = vmatpush1.msra.mxu0 0.0
    %1754 = vmatprep.subr.mxu0 0.0
    %1755 = vmatpush1.msra.mxu0 0.0
    %1756 = vmatprep.subr.mxu0 0.0
    %1757 = vmatpush1.msra.mxu0 0.0
    %1758 = vmatprep.subr.mxu0 0.0
    %1759 = vmatpush1.msra.mxu0 0.0
    %1760 = vmatprep.subr.mxu0 0.0
    %1761 = vmatpush1.msra.mxu0 0.0
    %1762 = vmatprep.subr.mxu0 0.0
    %1763 = vmatpush1.msra.mxu0 0.0
    %1764 = vmatprep.subr.mxu0 0.0
    %1765 = vmatpush1.msra.mxu0 0.0
    %1766 = vmatprep.subr.mxu0 0.0
    %1767 = vmatpush1.msra.mxu0 0.0
    %1768 = vmatprep.subr.mxu0 0.0
    %1769 = vmatpush1.msra.mxu0 0.0
    %1770 = vmatprep.subr.mxu0 0.0
    %1771 = vmatpush1.msra.mxu0 0.0
    %1772 = vmatprep.subr.mxu0 0.0
    %1773 = vmatpush1.msra.mxu0 0.0
    %1774 = vmatprep.subr.mxu0 0.0
    %1775 = vmatpush1.msra.mxu0 0.0
    %1776 = vmatprep.subr.mxu0 0.0
    %1777 = vmatpush1.msra.mxu0 0.0
    %1778 = vmatprep.subr.mxu0 0.0
    %1779 = vmatpush1.msra.mxu0 0.0
    %1780 = vmatprep.subr.mxu0 0.0
    %1781 = vmatpush1.msra.mxu0 0.0
    %1782 = vmatprep.subr.mxu0 0.0
    %1783 = vmatpush1.msra.mxu0 0.0
    %1784 = vmatprep.subr.mxu0 0.0
    %1785 = vmatpush1.msra.mxu0 0.0
    %1786 = vmatprep.subr.mxu0 0.0
    %1787 = vmatpush1.msra.mxu0 0.0
    %1788 = vmatprep.subr.mxu0 0.0
    %1789 = vmatpush1.msra.mxu0 0.0
    %1790 = vmatprep.subr.mxu0 0.0
    %1791 = vmatpush1.msra.mxu0 0.0
    %1792 = vmatprep.subr.mxu0 0.0
    %1793 = vmatpush1.msra.mxu0 0.0
    %1794 = vmatprep.mubr.f32.mxu0 0.0
    %1795 = vmatmul.mubr.f32.gmra.mrb[0].mxu0 %v1722
    %v1796 = vpop.f32.mrb[0].mxu0
    %v1797 = vadd.f32 0.0, %v1796
    %v1798 = vpop.f32.mrb[0].mxu0
    %1799 = vmatprep.mubr.f32.mxu0 0.0
    %1800 = vmatmul.mubr.f32.gmra.mrb[0].mxu0 %v1725
    %v1801 = vpop.f32.mrb[0].mxu0
    %v1802 = vadd.f32 0.0, %v1801
    %v1803 = vpop.f32.mrb[0].mxu0
    %1804 = vmatprep.mubr.f32.mxu0 0.0
    %1805 = vmatmul.mubr.f32.gmra.mrb[0].mxu0 %v1728
    %v1806 = vpop.f32.mrb[0].mxu0
    %v1807 = vadd.f32 0.0, %v1806
    %v1808 = vpop.f32.mrb[0].mxu0
    %1809 = vdwg.mxu0
    %v1810 = vadd.f32 %v1714, %v1797
    %v1811 = vadd.f32 %v1715, %v1802
    %v1812 = vadd.f32 %v1716, %v1807
    %v1813 = vld [vmem:[#allocation22] sm:$0x1]
    %v1815 = vlaneseq
    %v1816 = vshrl.u32 %v1815, 7
    %v1817 = vsub.s32 0, %v1816
    %v1818 = vrot.slane %v1813, %v1817
    %v1820 = vadd.f32 %v1810, %v1818
    %v1821 = vadd.f32 %v1811, %v1818
    %v1822 = vadd.f32 %v1812, %v1818
    %v1823 = vld [vmem:[#allocation23] sm:$0xff]
    %v1824 = vld [vmem:[#allocation23 + $0x8] sm:$0xff]
    %v1825 = vld [vmem:[#allocation23 + $0x10] sm:$0xff]
    %v1826 = vld [vmem:[#allocation23 + $0x18] sm:$0xff]
    %v1827 = vld [vmem:[#allocation25] sm:$0x1]
    %v1829 = vlaneseq
    %v1830 = vshrl.u32 %v1829, 7
    %v1831 = vsub.s32 0, %v1830
    %v1832 = vrot.slane %v1827, %v1831
    %v1835 = vsel %vm275, %v1820, 0
    %v1838 = vsel %vm275, %v1821, 0
    %v1841 = vsel %vm275, %v1822, 0
    %1843 = vmatprep.subr.mxu0 0.0
    %1844 = vmatpush1.msra.mxu0 %v1823
    %1845 = vmatprep.subr.mxu0 0.0
    %1846 = vmatpush1.msra.mxu0 %v1824
    %1847 = vmatprep.subr.mxu0 0.0
    %1848 = vmatpush1.msra.mxu0 %v1825
    %1849 = vmatprep.subr.mxu0 0.0
    %1850 = vmatpush1.msra.mxu0 %v1826
    %1851 = vmatprep.subr.mxu0 0.0
    %1852 = vmatpush1.msra.mxu0 0.0
    %1853 = vmatprep.subr.mxu0 0.0
    %1854 = vmatpush1.msra.mxu0 0.0
    %1855 = vmatprep.subr.mxu0 0.0
    %1856 = vmatpush1.msra.mxu0 0.0
    %1857 = vmatprep.subr.mxu0 0.0
    %1858 = vmatpush1.msra.mxu0 0.0
    %1859 = vmatprep.subr.mxu0 0.0
    %1860 = vmatpush1.msra.mxu0 0.0
    %1861 = vmatprep.subr.mxu0 0.0
    %1862 = vmatpush1.msra.mxu0 0.0
    %1863 = vmatprep.subr.mxu0 0.0
    %1864 = vmatpush1.msra.mxu0 0.0
    %1865 = vmatprep.subr.mxu0 0.0
    %1866 = vmatpush1.msra.mxu0 0.0
    %1867 = vmatprep.subr.mxu0 0.0
    %1868 = vmatpush1.msra.mxu0 0.0
    %1869 = vmatprep.subr.mxu0 0.0
    %1870 = vmatpush1.msra.mxu0 0.0
    %1871 = vmatprep.subr.mxu0 0.0
    %1872 = vmatpush1.msra.mxu0 0.0
    %1873 = vmatprep.subr.mxu0 0.0
    %1874 = vmatpush1.msra.mxu0 0.0
    %1875 = vmatprep.subr.mxu0 0.0
    %1876 = vmatpush1.msra.mxu0 0.0
    %1877 = vmatprep.subr.mxu0 0.0
    %1878 = vmatpush1.msra.mxu0 0.0
    %1879 = vmatprep.subr.mxu0 0.0
    %1880 = vmatpush1.msra.mxu0 0.0
    %1881 = vmatprep.subr.mxu0 0.0
    %1882 = vmatpush1.msra.mxu0 0.0
    %1883 = vmatprep.subr.mxu0 0.0
    %1884 = vmatpush1.msra.mxu0 0.0
    %1885 = vmatprep.subr.mxu0 0.0
    %1886 = vmatpush1.msra.mxu0 0.0
    %1887 = vmatprep.subr.mxu0 0.0
    %1888 = vmatpush1.msra.mxu0 0.0
    %1889 = vmatprep.subr.mxu0 0.0
    %1890 = vmatpush1.msra.mxu0 0.0
    %1891 = vmatprep.subr.mxu0 0.0
    %1892 = vmatpush1.msra.mxu0 0.0
    %1893 = vmatprep.subr.mxu0 0.0
    %1894 = vmatpush1.msra.mxu0 0.0
    %1895 = vmatprep.subr.mxu0 0.0
    %1896 = vmatpush1.msra.mxu0 0.0
    %1897 = vmatprep.subr.mxu0 0.0
    %1898 = vmatpush1.msra.mxu0 0.0
    %1899 = vmatprep.subr.mxu0 0.0
    %1900 = vmatpush1.msra.mxu0 0.0
    %1901 = vmatprep.subr.mxu0 0.0
    %1902 = vmatpush1.msra.mxu0 0.0
    %1903 = vmatprep.subr.mxu0 0.0
    %1904 = vmatpush1.msra.mxu0 0.0
    %1905 = vmatprep.subr.mxu0 0.0
    %1906 = vmatpush1.msra.mxu0 0.0
    %1907 = vmatprep.mubr.f32.mxu0 0.0
    %1908 = vmatmul.mubr.f32.gmra.mrb[0].mxu0 %v1835
    %v1909 = vpop.f32.mrb[0].mxu0
    %v1910 = vadd.f32 %v1832, %v1909
    %v1911 = vpop.f32.mrb[0].mxu0
    %1912 = vmatprep.mubr.f32.mxu0 0.0
    %1913 = vmatmul.mubr.f32.gmra.mrb[0].mxu0 %v1838
    %v1914 = vpop.f32.mrb[0].mxu0
    %v1915 = vadd.f32 %v1832, %v1914
    %v1916 = vpop.f32.mrb[0].mxu0
    %1917 = vmatprep.mubr.f32.mxu0 0.0
    %1918 = vmatmul.mubr.f32.gmra.mrb[0].mxu0 %v1841
    %v1919 = vpop.f32.mrb[0].mxu0
    %v1920 = vadd.f32 %v1832, %v1919
    %v1921 = vpop.f32.mrb[0].mxu0
    %1922 = vdwg.mxu0
    %v1923 = vmul.f32 %v1910, %v1910
    %v1924 = vmul.f32 %v1915, %v1915
    %v1925 = vmul.f32 %v1920, %v1920
    %vm1926 = vcmask 130048
    %v1927 = vsel %vm1926, %v1923, 0.0
    %1928 = vadd.xlane.f32.xlu0 %v1927
    %v1929 = vpop.xlane.xlu0 %1928
    %v1930 = vsel %vm1926, %v1924, 0.0
    %1931 = vadd.xlane.f32.xlu0 %v1930
    %v1932 = vpop.xlane.xlu0 %1931
    %v1933 = vsel %vm1926, %v1925, 0.0
    %1934 = vadd.xlane.f32.xlu0 %v1933
    %v1935 = vpop.xlane.xlu0 %1934
    %v1936 = vmax.f32 %v1929, 1e-24
    %v1937 = vmax.f32 %v1932, 1e-24
    %v1938 = vmax.f32 %v1935, 1e-24
    %v1939 = vrsqrt.pop %v1936
    %v1940 = vrsqrt.pop %v1937
    %v1941 = vrsqrt.pop %v1938
    %1945 = vrot.lane.b32.xlu0 %v1923, 112
    %v1946 = vpop.permute.xlu0 %1945
    %1947 = vrot.lane.b32.xlu0 %v1924, 112
    %v1948 = vpop.permute.xlu0 %1947
    %1949 = vrot.lane.b32.xlu0 %v1925, 112
    %v1950 = vpop.permute.xlu0 %1949
    %v1954 = vsel %vm1926, %v1946, 0.0
    %1955 = vadd.xlane.f32.xlu0 %v1954
    %v1956 = vpop.xlane.xlu0 %1955
    %v1957 = vsel %vm1926, %v1948, 0.0
    %1958 = vadd.xlane.f32.xlu0 %v1957
    %v1959 = vpop.xlane.xlu0 %1958
    %v1960 = vsel %vm1926, %v1950, 0.0
    %1961 = vadd.xlane.f32.xlu0 %v1960
    %v1962 = vpop.xlane.xlu0 %1961
    %v1963 = vmax.f32 %v1956, 1e-24
    %v1964 = vmax.f32 %v1959, 1e-24
    %v1965 = vmax.f32 %v1962, 1e-24
    %v1966 = vrsqrt.pop %v1963
    %v1967 = vrsqrt.pop %v1964
    %v1968 = vrsqrt.pop %v1965
    %v1969 = vlaneseq
    %v1970 = vand.u32 %v1969, 127
    %vm1971 = vcmp.lt.s32.totalorder %v1970, 16
    %v1972 = vsel %vm1971, %v1939, %v1966
    %v1973 = vsel %vm1971, %v1940, %v1967
    %v1974 = vsel %vm1971, %v1941, %v1968
    %v1975 = vmul.f32 %v1910, %v1972
    %v1976 = vmul.f32 %v1915, %v1973
    %v1977 = vmul.f32 %v1920, %v1974
    %1978 = vst.msk [vmem:[%s21] sm:$0xff] %vm275, %v1975
    %1979 = vst.msk [vmem:[%s21 + $0x8] sm:$0xff] %vm275, %v1976
    %1980 = vst.msk [vmem:[%s21 + $0x10] sm:$0xff] %vm275, %v1977
    // Predicated region
    $region146: #{forward_pallas.1} parent=1 // pred_check
      _
    $region147: #{forward_pallas.1} parent=1 // pred_check_branch
      %1982 = sbr.rel (0) target = $region149
    $region148: #{forward_pallas.1} parent=1 // pred_region
      _
    $region149: #{forward_pallas.1} parent=1 // pred_fallthru
      _
    // Predicated region
    $region150: #{forward_pallas.1} parent=1 // pred_check
      _
    $region151: #{forward_pallas.1} parent=1 // pred_check_branch
      %1984 = sbr.rel (0) target = $region153
    $region152: #{forward_pallas.1} parent=1 // pred_region
      _
    $region153: #{forward_pallas.1} parent=1 // pred_fallthru
      _
    %1985 = vsyncpa [#allocation4], 1
    %1986 = vsyncpa [#allocation6], 1
    %1987 = vsyncpa [#allocation9], 1
    %1988 = vsyncpa [#allocation12], 1
    %1989 = vsyncpa [#allocation15], 1
    %1990 = vsyncpa [#allocation18], 1
    %1991 = vsyncpa [#allocation21], 1
    %1992 = vsyncpa [#allocation24], 1

</llo_original>
